<compile_context>
chip_gen: v7x
topology: tpu7x:2x2x1
jax: 0.10.0
libtpu: 0.0.40
codegen_flags: <defaults>
</compile_context>

<pallas_src>
import functools

import jax
import jax.numpy as jnp
import numpy as np
from jax.experimental import pallas as pl
from jax.experimental.pallas import tpu as pltpu


# ----------------------------- Pallas kernel --------------------------------
def _conv3x3s2_bn_relu_kernel(p_ref, w_ref, scale_ref, shift_ref, o_ref, acc_ref, *, wq):
    """One block (whole image or row block) of conv3x3/stride2/pad1 + BN affine + ReLU.

    p_ref:     (1, (t+2)*wq, 4*Cin)  phase-packed padded input rows.  Row-phase i,
               col-pair j holds [even row 2i col 2j | col 2j+1 | odd row 2i+1 col 2j |
               col 2j+1] * Cin.  Two trailing row-phases are halo / zero padding.
    w_ref:     (4, 4*Cin, Coutp)     tap-group weights (zero rows where a tap does not
               apply): [0]=base, [1]=+1 col-pair (kw=2), [2]=+1 row-phase (kh=2),
               [3]=+1 row-phase & +1 col-pair (kh=2, kw=2).  Unscaled, compute dtype.
    scale_ref: (1, Coutp)            folded BN scale (f32), applied in the epilogue.
    shift_ref: (1, Coutp)            folded BN shift (f32).
    o_ref:     (1, t*wq, Cout)       output rows; column j == wq-1 is a phantom column
               the wrapper drops (its values may read halo garbage, never OOB).
    acc_ref:   (t*wq, Coutp) f32     VMEM accumulator scratch.
    """
    l = o_ref.shape[1]
    cout = o_ref.shape[2]
    offsets = (0, 1, wq, wq + 1)

    acc_ref[...] = jnp.dot(p_ref[0, 0:l, :], w_ref[0],
                           preferred_element_type=jnp.float32)
    for k in range(1, 4):
        o = offsets[k]
        acc_ref[...] += jnp.dot(p_ref[0, o:o + l, :], w_ref[k],
                                preferred_element_type=jnp.float32)

    # BN affine + ReLU in f32 (scale kept out of the bf16 weights for accuracy).
    y = jnp.maximum(acc_ref[...] * scale_ref[...] + shift_ref[...], 0.0)
    o_ref[0, :, :] = y[:, 0:cout].astype(o_ref.dtype)


# ------------------------------ glue (JAX) -----------------------------------
def _vmem_bytes_estimate(t, wq, c4, cout, coutp, in_bytes, out_bytes):
    l = t * wq
    r = (t + 2) * wq
    return (l * coutp * 4                 # f32 accumulator scratch
            + 2 * r * c4 * in_bytes       # double-buffered input block
            + 2 * l * cout * out_bytes    # double-buffered output block
            + 4 * c4 * coutp * in_bytes   # weights
            + 4 * coutp * 4)              # scale / shift


def _pick_num_row_blocks(ho, wq, c4, cout, coutp, in_bytes, out_bytes, n_images,
                         budget_bytes):
    """Fewest row blocks (largest tile) whose per-step VMEM estimate fits the budget."""
    divisors = [d for d in range(1, ho + 1) if ho % d == 0]
    nb = ho
    for d in divisors:
        if _vmem_bytes_estimate(ho // d, wq, c4, cout, coutp, in_bytes, out_bytes) \
                <= budget_bytes:
            nb = d
            break
    if n_images * nb < 2:                 # give both v7x TensorCores work when cheap
        for d in divisors:
            if 2 <= d <= 4:
                nb = max(nb, d)
                break
    return nb


def conv3x3s2_bn_relu(x_nhwc, w_oihw, gamma, beta, mean, var, *,
                      eps=1e-4, compute_dtype=jnp.bfloat16, out_dtype=None,
                      vmem_budget_bytes=36 * 1024 * 1024):
    """Conv2d(3,2,1,bias=False) + BatchNorm(eps, eval mode) + ReLU.  x_nhwc: [N,H,W,Cin]."""
    n, h, w, cin = x_nhwc.shape
    cout = w_oihw.shape[0]
    if out_dtype is None:
        out_dtype = x_nhwc.dtype
    ho = (h - 1) // 2 + 1
    wo = (w - 1) // 2 + 1
    wq = wo + 1                                   # col-pairs incl. one phantom output col
    c4 = 4 * cin
    coutp = ((cout + 127) // 128) * 128
    in_bytes = jnp.dtype(compute_dtype).itemsize
    out_bytes = jnp.dtype(out_dtype).itemsize

    # ---- BN (eval mode) as a per-channel f32 affine, applied in the kernel epilogue ----
    scale = gamma * jax.lax.rsqrt(var + eps)
    shift = beta - mean * scale
    scale_p = jnp.pad(scale, (0, coutp - cout)).reshape(1, coutp).astype(jnp.float32)
    shift_p = jnp.pad(shift, (0, coutp - cout)).reshape(1, coutp).astype(jnp.float32)

    # ---- pack the 3x3 taps into 4 (4*Cin, Coutp) matrices matching the phase layout ----
    wt = jnp.transpose(w_oihw, (2, 3, 1, 0))      # (kh, kw, cin, cout)
    z = jnp.zeros((cin, cout), wt.dtype)
    w_groups = jnp.stack([
        jnp.concatenate([wt[0, 0], wt[0, 1], wt[1, 0], wt[1, 1]], axis=0),  # base
        jnp.concatenate([wt[0, 2], z,        wt[1, 2], z       ], axis=0),  # +1 col-pair
        jnp.concatenate([wt[2, 0], wt[2, 1], z,        z       ], axis=0),  # +1 row-phase
        jnp.concatenate([wt[2, 2], z,        z,        z       ], axis=0),  # +1 row, +1 col
    ], axis=0)                                    # (4, 4*cin, cout)
    w_groups = jnp.pad(w_groups, ((0, 0), (0, 0), (0, coutp - cout))).astype(compute_dtype)

    # ---- phase-packed padded input: ONE fused pad + transpose + reshape + cast ----
    hp2 = 2 * (ho + 2)                            # padded rows incl. one extra zero phase
    wp = 2 * wq
    xq = jnp.pad(x_nhwc.astype(compute_dtype),
                 ((0, 0), (1, hp2 - h - 1), (1, wp - w - 1), (0, 0)))
    p = (xq.reshape(n, ho + 2, 2, wq, 2, cin)
           .transpose(0, 1, 3, 2, 4, 5)
           .reshape(n, (ho + 2) * wq, c4))        # (n, R, 4*cin)

    # ---- blocking: whole image per grid step unless it would blow the VMEM budget ----
    nb = _pick_num_row_blocks(ho, wq, c4, cout, coutp, in_bytes, out_bytes, n,
                              vmem_budget_bytes)
    t = ho // nb
    l = t * wq
    r = (t + 2) * wq
    if nb == 1:
        pb = p                                    # no extra copy / gather
    else:
        # large-image fallback: duplicate the 2-row-phase halo per block (cost (t+2)/t)
        idx = (jnp.arange(nb)[:, None] * t + jnp.arange(t + 2)[None, :]).reshape(-1)
        pb = jnp.take(p.reshape(n, ho + 2, wq, c4), idx, axis=1).reshape(n * nb, r, c4)

    kernel = functools.partial(_conv3x3s2_bn_relu_kernel, wq=wq)
    out = pl.pallas_call(
        kernel,
        out_shape=jax.ShapeDtypeStruct((n * nb, l, cout), out_dtype),
        grid_spec=pltpu.PrefetchScalarGridSpec(
            num_scalar_prefetch=0,
            grid=(n * nb,),
            in_specs=[
                pl.BlockSpec((1, r, c4), lambda i: (i, 0, 0)),
                pl.BlockSpec((4, c4, coutp), lambda i: (0, 0, 0)),
                pl.BlockSpec((1, coutp), lambda i: (0, 0)),
                pl.BlockSpec((1, coutp), lambda i: (0, 0)),
            ],
            out_specs=pl.BlockSpec((1, l, cout), lambda i: (i, 0, 0)),
            scratch_shapes=[pltpu.VMEM((l, coutp), jnp.float32)]),
        compiler_params=pltpu.CompilerParams(
            dimension_semantics=("parallel",),
            vmem_limit_bytes=48 * 1024 * 1024),
    )(pb, w_groups, scale_p, shift_p)

    # (n*nb, t*wq, cout) -> (n, ho, wq, cout) -> drop the phantom column -> NHWC
    return out.reshape(n, ho, wq, cout)[:, :, :wo, :]


def patch_embed_forward(x_nchw, params, *, eps=1e-4, compute_dtype=jnp.bfloat16):
    """PatchEmbed.forward: Identity -> (conv+bn+relu) x 2.  Input/Output: NCHW."""
    x = jnp.transpose(x_nchw, (0, 2, 3, 1))            # NCHW -> NHWC
    # stage-1 intermediate stored in compute dtype (bf16 in production) -- stage 2 reads it
    x = conv3x3s2_bn_relu(x, params["w1"], params["g1"], params["b1"],
                          params["m1"], params["v1"], eps=eps,
                          compute_dtype=compute_dtype, out_dtype=compute_dtype)
    x = conv3x3s2_bn_relu(x, params["w2"], params["g2"], params["b2"],
                          params["m2"], params["v2"], eps=eps,
                          compute_dtype=compute_dtype, out_dtype=x_nchw.dtype)
    return jnp.transpose(x, (0, 3, 1, 2))              # NHWC -> NCHW


# --------------------------- pure-JAX reference -------------------------------
def _ref_stage(x_nchw, w, gamma, beta, mean, var, eps=1e-4):
    y = jax.lax.conv_general_dilated(
        x_nchw, w, window_strides=(2, 2), padding=((1, 1), (1, 1)),
        dimension_numbers=("NCHW", "OIHW", "NCHW"))
    scale = (gamma / jnp.sqrt(var + eps)).reshape(1, -1, 1, 1)
    shift = (beta - mean * gamma / jnp.sqrt(var + eps)).reshape(1, -1, 1, 1)
    return jnp.maximum(y * scale + shift, 0.0)


def _ref_forward(x_nchw, p, eps=1e-4):
    x = _ref_stage(x_nchw, p["w1"], p["g1"], p["b1"], p["m1"], p["v1"], eps)
    x = _ref_stage(x, p["w2"], p["g2"], p["b2"], p["m2"], p["v2"], eps)
    return x


# ---------------------------------- main --------------------------------------
if __name__ == "__main__":
    # small, conv-friendly shapes: PatchEmbed(in_chans=4, in_dim=32, dim=64)
    N, C_IN, H, W = 2, 4, 16, 16
    IN_DIM, DIM = 32, 64

    key = jax.random.PRNGKey(0)
    ks = jax.random.split(key, 11)

    x = jax.random.normal(ks[0], (N, C_IN, H, W), dtype=jnp.float32)

    params = {
        # conv1: [Cout, Cin, 3, 3]
        "w1": jax.random.normal(ks[1], (IN_DIM, C_IN, 3, 3), jnp.float32) * 0.1,
        "g1": jax.random.normal(ks[2], (IN_DIM,), jnp.float32) * 0.1 + 1.0,
        "b1": jax.random.normal(ks[3], (IN_DIM,), jnp.float32) * 0.1,
        "m1": jax.random.normal(ks[4], (IN_DIM,), jnp.float32) * 0.1,
        "v1": jax.random.uniform(ks[5], (IN_DIM,), jnp.float32, 0.5, 1.5),
        # conv2: [Cout, Cin, 3, 3]
        "w2": jax.random.normal(ks[6], (DIM, IN_DIM, 3, 3), jnp.float32) * 0.1,
        "g2": jax.random.normal(ks[7], (DIM,), jnp.float32) * 0.1 + 1.0,
        "b2": jax.random.normal(ks[8], (DIM,), jnp.float32) * 0.1,
        "m2": jax.random.normal(ks[9], (DIM,), jnp.float32) * 0.1,
        "v2": jax.random.uniform(ks[10], (DIM,), jnp.float32, 0.5, 1.5),
    }

    ref = jax.block_until_ready(_ref_forward(x, params))

    # exact-math path (f32 matmul inputs, f32 intermediate) -- tight tolerance
    fwd_f32 = jax.jit(lambda xx, pp: patch_embed_forward(xx, pp, compute_dtype=jnp.float32))
    out_f32 = jax.block_until_ready(fwd_f32(x, params))
    assert out_f32.shape == (N, DIM, H // 4, W // 4), out_f32.shape
    np.testing.assert_allclose(np.asarray(out_f32), np.asarray(ref), rtol=5e-4, atol=5e-4)

    # production path (bf16 streams + intermediate, f32 accumulation/epilogue)
    fwd_bf16 = jax.jit(lambda xx, pp: patch_embed_forward(xx, pp, compute_dtype=jnp.bfloat16))
    out_bf16 = jax.block_until_ready(fwd_bf16(x, params))
    assert out_bf16.shape == (N, DIM, H // 4, W // 4), out_bf16.shape
    np.testing.assert_allclose(np.asarray(out_bf16), np.asarray(ref), rtol=5e-2, atol=5e-2)

    print("KERNEL_OK")
</pallas_src>

<mosaic_0001>
module attributes {stable_mosaic.version = 11 : i64} {
  func.func @_conv3x3s2_bn_relu_kernel(%arg0: i32, %arg1: memref<1x90x16xf32, #tpu.memory_space<vmem>>, %arg2: memref<4x16x128xf32, #tpu.memory_space<vmem>>, %arg3: memref<1x128xf32, #tpu.memory_space<vmem>>, %arg4: memref<1x128xf32, #tpu.memory_space<vmem>>, %arg5: memref<1x72x32xf32, #tpu.memory_space<vmem>>, %arg6: memref<72x128xf32, #tpu.memory_space<vmem>>) attributes {dimension_semantics = [#tpu.dimension_semantics<parallel>], iteration_bounds = array<i64: 2>, scalar_prefetch = 0 : i64, scratch_operands = 1 : i64, tpu.core_type = #tpu.core_type<tc>, window_params = [{transform_indices = @transform_0, window_bounds = array<i64: 1, 90, 16>}, {pipeline_mode = #tpu.pipeline_mode<synchronous>, transform_indices = @transform_1, window_bounds = array<i64: 4, 16, 128>}, {pipeline_mode = #tpu.pipeline_mode<synchronous>, transform_indices = @transform_2, window_bounds = array<i64: 1, 128>}, {pipeline_mode = #tpu.pipeline_mode<synchronous>, transform_indices = @transform_3, window_bounds = array<i64: 1, 128>}, {transform_indices = @transform_4, window_bounds = array<i64: 1, 72, 32>}]} {
    %c0 = arith.constant 0 : index
    %c0_0 = arith.constant 0 : index
    %c0_1 = arith.constant 0 : index
    %0 = vector.load %arg1[%c0, %c0_0, %c0_1] : memref<1x90x16xf32, #tpu.memory_space<vmem>>, vector<1x72x16xf32>
    %1 = vector.shape_cast %0 : vector<1x72x16xf32> to vector<72x16xf32>
    %c0_2 = arith.constant 0 : index
    %c0_3 = arith.constant 0 : index
    %c0_4 = arith.constant 0 : index
    %2 = vector.load %arg2[%c0_2, %c0_3, %c0_4] : memref<4x16x128xf32, #tpu.memory_space<vmem>>, vector<1x16x128xf32>
    %3 = vector.shape_cast %2 : vector<1x16x128xf32> to vector<16x128xf32>
    %cst = arith.constant dense<0.000000e+00> : vector<72x128xf32>
    %4 = tpu.matmul %1, %3, %cst {dimension_numbers = #tpu.dot_dimension_numbers<[1], [0], [0], [1], [0, 0, 1, 1], [], []>} : vector<72x16xf32>, vector<16x128xf32>, vector<72x128xf32> -> vector<72x128xf32>
    %c0_5 = arith.constant 0 : index
    %c0_6 = arith.constant 0 : index
    %5 = vector.load %arg6[%c0_5, %c0_6] : memref<72x128xf32, #tpu.memory_space<vmem>>, vector<72x128xf32>
    tpu.vector_store %arg6[%c0_5, %c0_6], %4 {strides = array<i32>} : memref<72x128xf32, #tpu.memory_space<vmem>>, vector<72x128xf32>,
    %c0_7 = arith.constant 0 : index
    %c0_8 = arith.constant 0 : index
    %6 = vector.load %arg6[%c0_7, %c0_8] : memref<72x128xf32, #tpu.memory_space<vmem>>, vector<72x128xf32>
    %c0_9 = arith.constant 0 : index
    %c1 = arith.constant 1 : index
    %c0_10 = arith.constant 0 : index
    %7 = vector.load %arg1[%c0_9, %c1, %c0_10] : memref<1x90x16xf32, #tpu.memory_space<vmem>>, vector<1x72x16xf32>
    %8 = vector.shape_cast %7 : vector<1x72x16xf32> to vector<72x16xf32>
    %c1_11 = arith.constant 1 : index
    %c0_12 = arith.constant 0 : index
    %c0_13 = arith.constant 0 : index
    %9 = vector.load %arg2[%c1_11, %c0_12, %c0_13] : memref<4x16x128xf32, #tpu.memory_space<vmem>>, vector<1x16x128xf32>
    %10 = vector.shape_cast %9 : vector<1x16x128xf32> to vector<16x128xf32>
    %cst_14 = arith.constant dense<0.000000e+00> : vector<72x128xf32>
    %11 = tpu.matmul %8, %10, %cst_14 {dimension_numbers = #tpu.dot_dimension_numbers<[1], [0], [0], [1], [0, 0, 1, 1], [], []>} : vector<72x16xf32>, vector<16x128xf32>, vector<72x128xf32> -> vector<72x128xf32>
    %12 = arith.addf %6, %11 : vector<72x128xf32>
    %c0_15 = arith.constant 0 : index
    %c0_16 = arith.constant 0 : index
    %13 = vector.load %arg6[%c0_15, %c0_16] : memref<72x128xf32, #tpu.memory_space<vmem>>, vector<72x128xf32>
    tpu.vector_store %arg6[%c0_15, %c0_16], %12 {strides = array<i32>} : memref<72x128xf32, #tpu.memory_space<vmem>>, vector<72x128xf32>,
    %c0_17 = arith.constant 0 : index
    %c0_18 = arith.constant 0 : index
    %14 = vector.load %arg6[%c0_17, %c0_18] : memref<72x128xf32, #tpu.memory_space<vmem>>, vector<72x128xf32>
    %c0_19 = arith.constant 0 : index
    %c9 = arith.constant 9 : index
    %c0_20 = arith.constant 0 : index
    %15 = vector.load %arg1[%c0_19, %c9, %c0_20] : memref<1x90x16xf32, #tpu.memory_space<vmem>>, vector<1x72x16xf32>
    %16 = vector.shape_cast %15 : vector<1x72x16xf32> to vector<72x16xf32>
    %c2 = arith.constant 2 : index
    %c0_21 = arith.constant 0 : index
    %c0_22 = arith.constant 0 : index
    %17 = vector.load %arg2[%c2, %c0_21, %c0_22] : memref<4x16x128xf32, #tpu.memory_space<vmem>>, vector<1x16x128xf32>
    %18 = vector.shape_cast %17 : vector<1x16x128xf32> to vector<16x128xf32>
    %cst_23 = arith.constant dense<0.000000e+00> : vector<72x128xf32>
    %19 = tpu.matmul %16, %18, %cst_23 {dimension_numbers = #tpu.dot_dimension_numbers<[1], [0], [0], [1], [0, 0, 1, 1], [], []>} : vector<72x16xf32>, vector<16x128xf32>, vector<72x128xf32> -> vector<72x128xf32>
    %20 = arith.addf %14, %19 : vector<72x128xf32>
    %c0_24 = arith.constant 0 : index
    %c0_25 = arith.constant 0 : index
    %21 = vector.load %arg6[%c0_24, %c0_25] : memref<72x128xf32, #tpu.memory_space<vmem>>, vector<72x128xf32>
    tpu.vector_store %arg6[%c0_24, %c0_25], %20 {strides = array<i32>} : memref<72x128xf32, #tpu.memory_space<vmem>>, vector<72x128xf32>,
    %c0_26 = arith.constant 0 : index
    %c0_27 = arith.constant 0 : index
    %22 = vector.load %arg6[%c0_26, %c0_27] : memref<72x128xf32, #tpu.memory_space<vmem>>, vector<72x128xf32>
    %c0_28 = arith.constant 0 : index
    %c10 = arith.constant 10 : index
    %c0_29 = arith.constant 0 : index
    %23 = vector.load %arg1[%c0_28, %c10, %c0_29] : memref<1x90x16xf32, #tpu.memory_space<vmem>>, vector<1x72x16xf32>
    %24 = vector.shape_cast %23 : vector<1x72x16xf32> to vector<72x16xf32>
    %c3 = arith.constant 3 : index
    %c0_30 = arith.constant 0 : index
    %c0_31 = arith.constant 0 : index
    %25 = vector.load %arg2[%c3, %c0_30, %c0_31] : memref<4x16x128xf32, #tpu.memory_space<vmem>>, vector<1x16x128xf32>
    %26 = vector.shape_cast %25 : vector<1x16x128xf32> to vector<16x128xf32>
    %cst_32 = arith.constant dense<0.000000e+00> : vector<72x128xf32>
    %27 = tpu.matmul %24, %26, %cst_32 {dimension_numbers = #tpu.dot_dimension_numbers<[1], [0], [0], [1], [0, 0, 1, 1], [], []>} : vector<72x16xf32>, vector<16x128xf32>, vector<72x128xf32> -> vector<72x128xf32>
    %28 = arith.addf %22, %27 : vector<72x128xf32>
    %c0_33 = arith.constant 0 : index
    %c0_34 = arith.constant 0 : index
    %29 = vector.load %arg6[%c0_33, %c0_34] : memref<72x128xf32, #tpu.memory_space<vmem>>, vector<72x128xf32>
    tpu.vector_store %arg6[%c0_33, %c0_34], %28 {strides = array<i32>} : memref<72x128xf32, #tpu.memory_space<vmem>>, vector<72x128xf32>,
    %c0_35 = arith.constant 0 : index
    %c0_36 = arith.constant 0 : index
    %30 = vector.load %arg6[%c0_35, %c0_36] : memref<72x128xf32, #tpu.memory_space<vmem>>, vector<72x128xf32>
    %c0_37 = arith.constant 0 : index
    %c0_38 = arith.constant 0 : index
    %31 = vector.load %arg3[%c0_37, %c0_38] : memref<1x128xf32, #tpu.memory_space<vmem>>, vector<1x128xf32>
    %32 = vector.broadcast %31 : vector<1x128xf32> to vector<72x128xf32>
    %33 = arith.mulf %30, %32 : vector<72x128xf32>
    %c0_39 = arith.constant 0 : index
    %c0_40 = arith.constant 0 : index
    %34 = vector.load %arg4[%c0_39, %c0_40] : memref<1x128xf32, #tpu.memory_space<vmem>>, vector<1x128xf32>
    %35 = vector.broadcast %34 : vector<1x128xf32> to vector<72x128xf32>
    %36 = arith.addf %33, %35 : vector<72x128xf32>
    %cst_41 = arith.constant 0.000000e+00 : f32
    %37 = vector.broadcast %cst_41 : f32 to vector<72x128xf32>
    %38 = arith.maximumf %36, %37 : vector<72x128xf32>
    %39 = vector.extract_strided_slice %38 {offsets = [0, 0], sizes = [72, 32], strides = [1, 1]} : vector<72x128xf32> to vector<72x32xf32>
    %c0_42 = arith.constant 0 : index
    %c0_43 = arith.constant 0 : index
    %c0_44 = arith.constant 0 : index
    %40 = vector.load %arg5[%c0_42, %c0_43, %c0_44] : memref<1x72x32xf32, #tpu.memory_space<vmem>>, vector<1x72x32xf32>
    %41 = vector.shape_cast %40 : vector<1x72x32xf32> to vector<72x32xf32>
    %42 = vector.shape_cast %39 : vector<72x32xf32> to vector<1x72x32xf32>
    tpu.vector_store %arg5[%c0_42, %c0_43, %c0_44], %42 {strides = array<i32>} : memref<1x72x32xf32, #tpu.memory_space<vmem>>, vector<1x72x32xf32>,
    return
  }
  func.func @transform_0(%arg0: i32) -> (i32, i32, i32) {
    %c0_i32 = arith.constant 0 : i32
    %c0_i32_0 = arith.constant 0 : i32
    %c0_i32_1 = arith.constant 0 : i32
    return %arg0, %c0_i32, %c0_i32_0 : i32, i32, i32
  }
  func.func @transform_1(%arg0: i32) -> (i32, i32, i32) {
    %c0_i32 = arith.constant 0 : i32
    %c0_i32_0 = arith.constant 0 : i32
    %c0_i32_1 = arith.constant 0 : i32
    %c0_i32_2 = arith.constant 0 : i32
    return %c0_i32, %c0_i32_0, %c0_i32_1 : i32, i32, i32
  }
  func.func @transform_2(%arg0: i32) -> (i32, i32) {
    %c0_i32 = arith.constant 0 : i32
    %c0_i32_0 = arith.constant 0 : i32
    %c0_i32_1 = arith.constant 0 : i32
    return %c0_i32, %c0_i32_0 : i32, i32
  }
  func.func @transform_3(%arg0: i32) -> (i32, i32) {
    %c0_i32 = arith.constant 0 : i32
    %c0_i32_0 = arith.constant 0 : i32
    %c0_i32_1 = arith.constant 0 : i32
    return %c0_i32, %c0_i32_0 : i32, i32
  }
  func.func @transform_4(%arg0: i32) -> (i32, i32, i32) {
    %c0_i32 = arith.constant 0 : i32
    %c0_i32_0 = arith.constant 0 : i32
    %c0_i32_1 = arith.constant 0 : i32
    return %arg0, %c0_i32, %c0_i32_0 : i32, i32, i32
  }
}

module attributes {stable_mosaic.version = 11 : i64} {
  func.func @_conv3x3s2_bn_relu_kernel(%arg0: i32, %arg1: memref<1x30x128xf32, #tpu.memory_space<vmem>>, %arg2: memref<4x128x128xf32, #tpu.memory_space<vmem>>, %arg3: memref<1x128xf32, #tpu.memory_space<vmem>>, %arg4: memref<1x128xf32, #tpu.memory_space<vmem>>, %arg5: memref<1x20x64xf32, #tpu.memory_space<vmem>>, %arg6: memref<20x128xf32, #tpu.memory_space<vmem>>) attributes {dimension_semantics = [#tpu.dimension_semantics<parallel>], iteration_bounds = array<i64: 2>, scalar_prefetch = 0 : i64, scratch_operands = 1 : i64, tpu.core_type = #tpu.core_type<tc>, window_params = [{transform_indices = @transform_0, window_bounds = array<i64: 1, 30, 128>}, {pipeline_mode = #tpu.pipeline_mode<synchronous>, transform_indices = @transform_1, window_bounds = array<i64: 4, 128, 128>}, {pipeline_mode = #tpu.pipeline_mode<synchronous>, transform_indices = @transform_2, window_bounds = array<i64: 1, 128>}, {pipeline_mode = #tpu.pipeline_mode<synchronous>, transform_indices = @transform_3, window_bounds = array<i64: 1, 128>}, {transform_indices = @transform_4, window_bounds = array<i64: 1, 20, 64>}]} {
    %c0 = arith.constant 0 : index
    %c0_0 = arith.constant 0 : index
    %c0_1 = arith.constant 0 : index
    %0 = vector.load %arg1[%c0, %c0_0, %c0_1] : memref<1x30x128xf32, #tpu.memory_space<vmem>>, vector<1x20x128xf32>
    %1 = vector.shape_cast %0 : vector<1x20x128xf32> to vector<20x128xf32>
    %c0_2 = arith.constant 0 : index
    %c0_3 = arith.constant 0 : index
    %c0_4 = arith.constant 0 : index
    %2 = vector.load %arg2[%c0_2, %c0_3, %c0_4] : memref<4x128x128xf32, #tpu.memory_space<vmem>>, vector<1x128x128xf32>
    %3 = vector.shape_cast %2 : vector<1x128x128xf32> to vector<128x128xf32>
    %cst = arith.constant dense<0.000000e+00> : vector<20x128xf32>
    %4 = tpu.matmul %1, %3, %cst {dimension_numbers = #tpu.dot_dimension_numbers<[1], [0], [0], [1], [0, 0, 1, 1], [], []>} : vector<20x128xf32>, vector<128x128xf32>, vector<20x128xf32> -> vector<20x128xf32>
    %c0_5 = arith.constant 0 : index
    %c0_6 = arith.constant 0 : index
    %5 = vector.load %arg6[%c0_5, %c0_6] : memref<20x128xf32, #tpu.memory_space<vmem>>, vector<20x128xf32>
    tpu.vector_store %arg6[%c0_5, %c0_6], %4 {strides = array<i32>} : memref<20x128xf32, #tpu.memory_space<vmem>>, vector<20x128xf32>,
    %c0_7 = arith.constant 0 : index
    %c0_8 = arith.constant 0 : index
    %6 = vector.load %arg6[%c0_7, %c0_8] : memref<20x128xf32, #tpu.memory_space<vmem>>, vector<20x128xf32>
    %c0_9 = arith.constant 0 : index
    %c1 = arith.constant 1 : index
    %c0_10 = arith.constant 0 : index
    %7 = vector.load %arg1[%c0_9, %c1, %c0_10] : memref<1x30x128xf32, #tpu.memory_space<vmem>>, vector<1x20x128xf32>
    %8 = vector.shape_cast %7 : vector<1x20x128xf32> to vector<20x128xf32>
    %c1_11 = arith.constant 1 : index
    %c0_12 = arith.constant 0 : index
    %c0_13 = arith.constant 0 : index
    %9 = vector.load %arg2[%c1_11, %c0_12, %c0_13] : memref<4x128x128xf32, #tpu.memory_space<vmem>>, vector<1x128x128xf32>
    %10 = vector.shape_cast %9 : vector<1x128x128xf32> to vector<128x128xf32>
    %cst_14 = arith.constant dense<0.000000e+00> : vector<20x128xf32>
    %11 = tpu.matmul %8, %10, %cst_14 {dimension_numbers = #tpu.dot_dimension_numbers<[1], [0], [0], [1], [0, 0, 1, 1], [], []>} : vector<20x128xf32>, vector<128x128xf32>, vector<20x128xf32> -> vector<20x128xf32>
    %12 = arith.addf %6, %11 : vector<20x128xf32>
    %c0_15 = arith.constant 0 : index
    %c0_16 = arith.constant 0 : index
    %13 = vector.load %arg6[%c0_15, %c0_16] : memref<20x128xf32, #tpu.memory_space<vmem>>, vector<20x128xf32>
    tpu.vector_store %arg6[%c0_15, %c0_16], %12 {strides = array<i32>} : memref<20x128xf32, #tpu.memory_space<vmem>>, vector<20x128xf32>,
    %c0_17 = arith.constant 0 : index
    %c0_18 = arith.constant 0 : index
    %14 = vector.load %arg6[%c0_17, %c0_18] : memref<20x128xf32, #tpu.memory_space<vmem>>, vector<20x128xf32>
    %c0_19 = arith.constant 0 : index
    %c5 = arith.constant 5 : index
    %c0_20 = arith.constant 0 : index
    %15 = vector.load %arg1[%c0_19, %c5, %c0_20] : memref<1x30x128xf32, #tpu.memory_space<vmem>>, vector<1x20x128xf32>
    %16 = vector.shape_cast %15 : vector<1x20x128xf32> to vector<20x128xf32>
    %c2 = arith.constant 2 : index
    %c0_21 = arith.constant 0 : index
    %c0_22 = arith.constant 0 : index
    %17 = vector.load %arg2[%c2, %c0_21, %c0_22] : memref<4x128x128xf32, #tpu.memory_space<vmem>>, vector<1x128x128xf32>
    %18 = vector.shape_cast %17 : vector<1x128x128xf32> to vector<128x128xf32>
    %cst_23 = arith.constant dense<0.000000e+00> : vector<20x128xf32>
    %19 = tpu.matmul %16, %18, %cst_23 {dimension_numbers = #tpu.dot_dimension_numbers<[1], [0], [0], [1], [0, 0, 1, 1], [], []>} : vector<20x128xf32>, vector<128x128xf32>, vector<20x128xf32> -> vector<20x128xf32>
    %20 = arith.addf %14, %19 : vector<20x128xf32>
    %c0_24 = arith.constant 0 : index
    %c0_25 = arith.constant 0 : index
    %21 = vector.load %arg6[%c0_24, %c0_25] : memref<20x128xf32, #tpu.memory_space<vmem>>, vector<20x128xf32>
    tpu.vector_store %arg6[%c0_24, %c0_25], %20 {strides = array<i32>} : memref<20x128xf32, #tpu.memory_space<vmem>>, vector<20x128xf32>,
    %c0_26 = arith.constant 0 : index
    %c0_27 = arith.constant 0 : index
    %22 = vector.load %arg6[%c0_26, %c0_27] : memref<20x128xf32, #tpu.memory_space<vmem>>, vector<20x128xf32>
    %c0_28 = arith.constant 0 : index
    %c6 = arith.constant 6 : index
    %c0_29 = arith.constant 0 : index
    %23 = vector.load %arg1[%c0_28, %c6, %c0_29] : memref<1x30x128xf32, #tpu.memory_space<vmem>>, vector<1x20x128xf32>
    %24 = vector.shape_cast %23 : vector<1x20x128xf32> to vector<20x128xf32>
    %c3 = arith.constant 3 : index
    %c0_30 = arith.constant 0 : index
    %c0_31 = arith.constant 0 : index
    %25 = vector.load %arg2[%c3, %c0_30, %c0_31] : memref<4x128x128xf32, #tpu.memory_space<vmem>>, vector<1x128x128xf32>
    %26 = vector.shape_cast %25 : vector<1x128x128xf32> to vector<128x128xf32>
    %cst_32 = arith.constant dense<0.000000e+00> : vector<20x128xf32>
    %27 = tpu.matmul %24, %26, %cst_32 {dimension_numbers = #tpu.dot_dimension_numbers<[1], [0], [0], [1], [0, 0, 1, 1], [], []>} : vector<20x128xf32>, vector<128x128xf32>, vector<20x128xf32> -> vector<20x128xf32>
    %28 = arith.addf %22, %27 : vector<20x128xf32>
    %c0_33 = arith.constant 0 : index
    %c0_34 = arith.constant 0 : index
    %29 = vector.load %arg6[%c0_33, %c0_34] : memref<20x128xf32, #tpu.memory_space<vmem>>, vector<20x128xf32>
    tpu.vector_store %arg6[%c0_33, %c0_34], %28 {strides = array<i32>} : memref<20x128xf32, #tpu.memory_space<vmem>>, vector<20x128xf32>,
    %c0_35 = arith.constant 0 : index
    %c0_36 = arith.constant 0 : index
    %30 = vector.load %arg6[%c0_35, %c0_36] : memref<20x128xf32, #tpu.memory_space<vmem>>, vector<20x128xf32>
    %c0_37 = arith.constant 0 : index
    %c0_38 = arith.constant 0 : index
    %31 = vector.load %arg3[%c0_37, %c0_38] : memref<1x128xf32, #tpu.memory_space<vmem>>, vector<1x128xf32>
    %32 = vector.broadcast %31 : vector<1x128xf32> to vector<20x128xf32>
    %33 = arith.mulf %30, %32 : vector<20x128xf32>
    %c0_39 = arith.constant 0 : index
    %c0_40 = arith.constant 0 : index
    %34 = vector.load %arg4[%c0_39, %c0_40] : memref<1x128xf32, #tpu.memory_space<vmem>>, vector<1x128xf32>
    %35 = vector.broadcast %34 : vector<1x128xf32> to vector<20x128xf32>
    %36 = arith.addf %33, %35 : vector<20x128xf32>
    %cst_41 = arith.constant 0.000000e+00 : f32
    %37 = vector.broadcast %cst_41 : f32 to vector<20x128xf32>
    %38 = arith.maximumf %36, %37 : vector<20x128xf32>
    %39 = vector.extract_strided_slice %38 {offsets = [0, 0], sizes = [20, 64], strides = [1, 1]} : vector<20x128xf32> to vector<20x64xf32>
    %c0_42 = arith.constant 0 : index
    %c0_43 = arith.constant 0 : index
    %c0_44 = arith.constant 0 : index
    %40 = vector.load %arg5[%c0_42, %c0_43, %c0_44] : memref<1x20x64xf32, #tpu.memory_space<vmem>>, vector<1x20x64xf32>
    %41 = vector.shape_cast %40 : vector<1x20x64xf32> to vector<20x64xf32>
    %42 = vector.shape_cast %39 : vector<20x64xf32> to vector<1x20x64xf32>
    tpu.vector_store %arg5[%c0_42, %c0_43, %c0_44], %42 {strides = array<i32>} : memref<1x20x64xf32, #tpu.memory_space<vmem>>, vector<1x20x64xf32>,
    return
  }
  func.func @transform_0(%arg0: i32) -> (i32, i32, i32) {
    %c0_i32 = arith.constant 0 : i32
    %c0_i32_0 = arith.constant 0 : i32
    %c0_i32_1 = arith.constant 0 : i32
    return %arg0, %c0_i32, %c0_i32_0 : i32, i32, i32
  }
  func.func @transform_1(%arg0: i32) -> (i32, i32, i32) {
    %c0_i32 = arith.constant 0 : i32
    %c0_i32_0 = arith.constant 0 : i32
    %c0_i32_1 = arith.constant 0 : i32
    %c0_i32_2 = arith.constant 0 : i32
    return %c0_i32, %c0_i32_0, %c0_i32_1 : i32, i32, i32
  }
  func.func @transform_2(%arg0: i32) -> (i32, i32) {
    %c0_i32 = arith.constant 0 : i32
    %c0_i32_0 = arith.constant 0 : i32
    %c0_i32_1 = arith.constant 0 : i32
    return %c0_i32, %c0_i32_0 : i32, i32
  }
  func.func @transform_3(%arg0: i32) -> (i32, i32) {
    %c0_i32 = arith.constant 0 : i32
    %c0_i32_0 = arith.constant 0 : i32
    %c0_i32_1 = arith.constant 0 : i32
    return %c0_i32, %c0_i32_0 : i32, i32
  }
  func.func @transform_4(%arg0: i32) -> (i32, i32, i32) {
    %c0_i32 = arith.constant 0 : i32
    %c0_i32_0 = arith.constant 0 : i32
    %c0_i32_1 = arith.constant 0 : i32
    return %arg0, %c0_i32, %c0_i32_0 : i32, i32, i32
  }
}

</mosaic_0001>

<llo_original>
// kernel: _lambda_.2
$region0: #{_lambda_.2}
  #allocation0 [shape = 'u32[]', space=smem, size = 0x4, offset = 0x4, fixed_abs, tag = 'smem constant byte address 0x4 - core index']
  #allocation1 [shape = 'u32[144,128]{1,0:T(1,128)}', space=vmem, size = 0x12000, scoped, tag = 'internal scratch']
  #allocation2 [shape = 'f32[72,128]{1,0:T(8,128)}', space=vmem, size = 0x9000, scoped, tag = 'scratch operand']
  %s0 = inlined_call_operand.vmem [shape: f32[2,90,16], index: 0, kind: input, shape index: {}]
  %s1 = inlined_call_operand.vmem [shape: f32[4,16,128], index: 1, kind: input, shape index: {}]
  %s2 = inlined_call_operand.vmem [shape: f32[1,128], index: 2, kind: input, shape index: {}]
  %s3 = inlined_call_operand.vmem [shape: f32[1,128], index: 3, kind: input, shape index: {}]
  %s4 = inlined_call_operand.vmem [shape: f32[2,72,32], index: 4, kind: output, shape index: {}]
  %s5 = sld [smem:[#allocation0]]
  $region49: #{_lambda_.2} parent=0
    _
  %s7 = ssub.s32 1, %s5
  %s8 = scalar_select 0, %s7, %s5
  loop: start=0, step=1, limit=4
  $region2: #{_lambda_.2} parent=0 // loop_pre_header
    _
  $region3: #{_lambda_.2} parent=0 // loop_header
    %s10 = sphi 0, %s14
    %p11 = scmp.ge.s32.totalorder %s10, 4
    %s20 = sphi 0, %s22
    %s23 = sphi 0, %s20
    %s24 = sphi 0, %s23
    %s40 = sphi 0, %s24
    %s44 = sphi 0, %s44
    %s46 = sphi 0, %s44
    %s47 = sphi 0, %s46
    %s61 = sphi 0, %s47
    %s65 = sphi 0, %s65
    %s67 = sphi 0, %s65
    %s68 = sphi 0, %s67
    %s82 = sphi 0, %s68
    %s86 = sphi 0, %s86
    %s88 = sphi 0, %s86
    %s89 = sphi 0, %s88
    %s103 = sphi 0, %s89
    %s109 = sphi 0, %s111
    %s112 = sphi 0, %s109
    %s113 = sphi 0, %s112
    %s129 = sphi 0, %s113
  $region4: #{_lambda_.2} parent=0 // loop_header_branch
    %13 = sbr.rel (%p11) target = $region8
  $region5: #{_lambda_.2} parent=0 // loop_body
    %s15 = ssub.s32 %s10, 1
    %s16 = ssub.s32 %s10, 2
    %s17 = sadd.s32 %s10, 1
    %s18 = ssub.s32 %s10, %s17
    %p19 = scmp.eq.s32.totalorder %s18, 0
    %s21 = sadd.s32 %s20, 1
    %s22 = scalar_select %p19, %s20, %s21
    %p25 = pneg %p19
    %p26 = scmp.eq.s32.totalorder %s10, 1
    %p27 = por %p25, %p26
    %p28 = scmp.ne.s32.totalorder %s20, %s23
    %p29 = scmp.eq.s32.totalorder %s10, 0
    %p30 = por %p28, %p29
    %p31 = scmp.ne.s32.totalorder %s20, %s23
    %p32 = scmp.eq.s32.totalorder %s15, 1
    %p33 = por %p31, %p32
    %p34 = scmp.ne.s32.totalorder %s23, %s24
    %p35 = scmp.eq.s32.totalorder %s15, 0
    %p36 = por %p34, %p35
    %p37 = scmp.ne.s32.totalorder %s23, %s24
    %p38 = scmp.eq.s32.totalorder %s16, 1
    %p39 = por %p37, %p38
    %p41 = scmp.ne.s32.totalorder %s24, %s40
    %p42 = scmp.eq.s32.totalorder %s16, 0
    %p43 = por %p41, %p42
    %s45 = sadd.s32 %s44, 1
    %p48 = scmp.eq.s32.totalorder %s10, 1
    %p49 = scmp.ne.s32.totalorder %s44, %s46
    %p50 = scmp.eq.s32.totalorder %s10, 0
    %p51 = por %p49, %p50
    %p52 = scmp.ne.s32.totalorder %s44, %s46
    %p53 = scmp.eq.s32.totalorder %s15, 1
    %p54 = por %p52, %p53
    %p55 = scmp.ne.s32.totalorder %s46, %s47
    %p56 = scmp.eq.s32.totalorder %s15, 0
    %p57 = por %p55, %p56
    %p58 = scmp.ne.s32.totalorder %s46, %s47
    %p59 = scmp.eq.s32.totalorder %s16, 1
    %p60 = por %p58, %p59
    %p62 = scmp.ne.s32.totalorder %s47, %s61
    %p63 = scmp.eq.s32.totalorder %s16, 0
    %p64 = por %p62, %p63
    %s66 = sadd.s32 %s65, 1
    %p69 = scmp.eq.s32.totalorder %s10, 1
    %p70 = scmp.ne.s32.totalorder %s65, %s67
    %p71 = scmp.eq.s32.totalorder %s10, 0
    %p72 = por %p70, %p71
    %p73 = scmp.ne.s32.totalorder %s65, %s67
    %p74 = scmp.eq.s32.totalorder %s15, 1
    %p75 = por %p73, %p74
    %p76 = scmp.ne.s32.totalorder %s67, %s68
    %p77 = scmp.eq.s32.totalorder %s15, 0
    %p78 = por %p76, %p77
    %p79 = scmp.ne.s32.totalorder %s67, %s68
    %p80 = scmp.eq.s32.totalorder %s16, 1
    %p81 = por %p79, %p80
    %p83 = scmp.ne.s32.totalorder %s68, %s82
    %p84 = scmp.eq.s32.totalorder %s16, 0
    %p85 = por %p83, %p84
    %s87 = sadd.s32 %s86, 1
    %p90 = scmp.eq.s32.totalorder %s10, 1
    %p91 = scmp.ne.s32.totalorder %s86, %s88
    %p92 = scmp.eq.s32.totalorder %s10, 0
    %p93 = por %p91, %p92
    %p94 = scmp.ne.s32.totalorder %s86, %s88
    %p95 = scmp.eq.s32.totalorder %s15, 1
    %p96 = por %p94, %p95
    %p97 = scmp.ne.s32.totalorder %s88, %s89
    %p98 = scmp.eq.s32.totalorder %s15, 0
    %p99 = por %p97, %p98
    %p100 = scmp.ne.s32.totalorder %s88, %s89
    %p101 = scmp.eq.s32.totalorder %s16, 1
    %p102 = por %p100, %p101
    %p104 = scmp.ne.s32.totalorder %s89, %s103
    %p105 = scmp.eq.s32.totalorder %s16, 0
    %p106 = por %p104, %p105
    %s107 = ssub.s32 %s10, %s17
    %p108 = scmp.eq.s32.totalorder %s107, 0
    %s110 = sadd.s32 %s109, 1
    %s111 = scalar_select %p108, %s109, %s110
    %p114 = pneg %p108
    %p115 = scmp.eq.s32.totalorder %s10, 1
    %p116 = por %p114, %p115
    %p117 = scmp.ne.s32.totalorder %s109, %s112
    %p118 = scmp.eq.s32.totalorder %s10, 0
    %p119 = por %p117, %p118
    %p120 = scmp.ne.s32.totalorder %s109, %s112
    %p121 = scmp.eq.s32.totalorder %s15, 1
    %p122 = por %p120, %p121
    %p123 = scmp.ne.s32.totalorder %s112, %s113
    %p124 = scmp.eq.s32.totalorder %s15, 0
    %p125 = por %p123, %p124
    %p126 = scmp.ne.s32.totalorder %s112, %s113
    %p127 = scmp.eq.s32.totalorder %s16, 1
    %p128 = por %p126, %p127
    %p130 = scmp.ne.s32.totalorder %s113, %s129
    %p131 = scmp.eq.s32.totalorder %s16, 0
    %p132 = por %p130, %p131
    %p133 = scmp.le.s32.totalorder 1, %s10
    %p134 = scmp.lt.s32.totalorder %s10, 3
    %p135 = pnand %p133, %p134
    %p136 = pneg %p135
    // Predicated region
    $region9: #{_lambda_.2} parent=5 // pred_check
      _
    $region10: #{_lambda_.2} parent=5 // pred_check_branch
      %138 = sbr.rel (%p135) target = $region12
    $region11: #{_lambda_.2} parent=5 // pred_region
      %s139 = ssub.s32 %s10, 1
      // Predicated region
      $region13: #{_lambda_.2} parent=11 // pred_check
        %p140 = pneg %p57
      $region14: #{_lambda_.2} parent=11 // pred_check_branch
        %142 = sbr.rel (%p140) target = $region16
      $region15: #{_lambda_.2} parent=11 // pred_region
        _
      $region16: #{_lambda_.2} parent=11 // pred_fallthru
        _
      // Predicated region
      $region17: #{_lambda_.2} parent=11 // pred_check
        %p143 = pneg %p78
      $region18: #{_lambda_.2} parent=11 // pred_check_branch
        %145 = sbr.rel (%p143) target = $region20
      $region19: #{_lambda_.2} parent=11 // pred_region
        _
      $region20: #{_lambda_.2} parent=11 // pred_fallthru
        _
      // Predicated region
      $region21: #{_lambda_.2} parent=11 // pred_check
        %p146 = pneg %p99
      $region22: #{_lambda_.2} parent=11 // pred_check_branch
        %148 = sbr.rel (%p146) target = $region24
      $region23: #{_lambda_.2} parent=11 // pred_region
        _
      $region24: #{_lambda_.2} parent=11 // pred_fallthru
        _
    $region12: #{_lambda_.2} parent=5 // pred_fallthru
      _
    %p149 = scmp.lt.s32.totalorder %s10, 2
    // Predicated region
    $region25: #{_lambda_.2} parent=5 // pred_check
      %p150 = pneg %p149
    $region26: #{_lambda_.2} parent=5 // pred_check_branch
      %152 = sbr.rel (%p150) target = $region28
    $region27: #{_lambda_.2} parent=5 // pred_region
      // Predicated region
      $region29: #{_lambda_.2} parent=27 // pred_check
        %p153 = pneg %p30
      $region30: #{_lambda_.2} parent=27 // pred_check_branch
        %155 = sbr.rel (%p153) target = $region32
      $region31: #{_lambda_.2} parent=27 // pred_region
        %p156 = scmp.lt.s32.totalorder %s10, 1
        %s157 = scalar_select %p156, %s10, 1
        %s158 = smul.addr %s157, 12
        %s159 = smul.addr %s158, 8
        %s160 = scalar_lea.vmem %s0, %s159
      $region32: #{_lambda_.2} parent=27 // pred_fallthru
        _
    $region28: #{_lambda_.2} parent=5 // pred_fallthru
      _
    %p161 = scmp.le.s32.totalorder 1, %s10
    %p162 = scmp.lt.s32.totalorder %s10, 3
    %p163 = pnand %p161, %p162
    %p164 = pneg %p163
    // Predicated region
    $region33: #{_lambda_.2} parent=5 // pred_check
      _
    $region34: #{_lambda_.2} parent=5 // pred_check_branch
      %166 = sbr.rel (%p163) target = $region36
    $region35: #{_lambda_.2} parent=5 // pred_region
      %s167 = ssub.s32 %s10, 1
      %p168 = scmp.lt.s32.totalorder %s15, 1
      %s169 = scalar_select %p168, %s15, 1
      %s170 = smul.addr %s169, 12
      %s171 = smul.addr %s170, 8
      %s172 = scalar_lea.vmem %s0, %s171
      %p173 = pneg %p36
      %p174 = pneg %p33
      %p175 = pneg %p57
      %p176 = pneg %p54
      %p177 = pneg %p78
      %p178 = pneg %p75
      %p179 = pneg %p99
      %p180 = pneg %p96
      %p181 = pneg %p125
      %p182 = pneg %p122
      %p183 = scmp.lt.s32.totalorder %s15, 1
      %s184 = scalar_select %p183, %s15, 1
      %s185 = smul.addr %s184, 9
      %s186 = smul.addr %s185, 8
      %s187 = scalar_lea.vmem %s4, %s186
      %p188 = scmp.lt.s32.totalorder %s15, 1
      %s189 = scalar_select %p188, %s15, 1
      %s190 = smul.addr %s189, 12
      %s191 = smul.addr %s190, 8
      %s192 = scalar_lea.vmem %s0, %s191
      %p193 = scmp.lt.s32.totalorder %s15, 1
      %s194 = scalar_select %p193, %s15, 1
      %s195 = smul.addr %s194, 9
      %s196 = smul.addr %s195, 8
      %s197 = scalar_lea.vmem %s4, %s196
      %v198 = vld [vmem:[%s192] sm:$0xff]
      %v199 = vld [vmem:[%s192 + $0x8] sm:$0xff]
      %v200 = vld [vmem:[%s192 + $0x10] sm:$0xff]
      %v201 = vld [vmem:[%s192 + $0x18] sm:$0xff]
      %v202 = vld [vmem:[%s192 + $0x20] sm:$0xff]
      %v203 = vld [vmem:[%s192 + $0x28] sm:$0xff]
      %v204 = vld [vmem:[%s192 + $0x30] sm:$0xff]
      %v205 = vld [vmem:[%s192 + $0x38] sm:$0xff]
      %v206 = vld [vmem:[%s192 + $0x40] sm:$0xff]
      %v207 = vld [vmem:[%s1] sm:$0xff]
      %v208 = vld [vmem:[%s1 + $0x8] sm:$0xff]
      %vm209 = vcmask 130048
      %v211 = vsel %vm209, %v198, 0
      %v214 = vsel %vm209, %v199, 0
      %v217 = vsel %vm209, %v200, 0
      %v220 = vsel %vm209, %v201, 0
      %v223 = vsel %vm209, %v202, 0
      %v226 = vsel %vm209, %v203, 0
      %v229 = vsel %vm209, %v204, 0
      %v232 = vsel %vm209, %v205, 0
      %v235 = vsel %vm209, %v206, 0
      %237 = vmatprep.subr.mxu0 0.0
      %238 = vmatpush1.msra.mxu0 %v207
      %239 = vmatprep.subr.mxu0 0.0
      %240 = vmatpush1.msra.mxu0 %v208
      %241 = vmatprep.subr.mxu0 0.0
      %242 = vmatpush1.msra.mxu0 0.0
      %243 = vmatprep.subr.mxu0 0.0
      %244 = vmatpush1.msra.mxu0 0.0
      %245 = vmatprep.subr.mxu0 0.0
      %246 = vmatpush1.msra.mxu0 0.0
      %247 = vmatprep.subr.mxu0 0.0
      %248 = vmatpush1.msra.mxu0 0.0
      %249 = vmatprep.subr.mxu0 0.0
      %250 = vmatpush1.msra.mxu0 0.0
      %251 = vmatprep.subr.mxu0 0.0
      %252 = vmatpush1.msra.mxu0 0.0
      %253 = vmatprep.subr.mxu0 0.0
      %254 = vmatpush1.msra.mxu0 0.0
      %255 = vmatprep.subr.mxu0 0.0
      %256 = vmatpush1.msra.mxu0 0.0
      %257 = vmatprep.subr.mxu0 0.0
      %258 = vmatpush1.msra.mxu0 0.0
      %259 = vmatprep.subr.mxu0 0.0
      %260 = vmatpush1.msra.mxu0 0.0
      %261 = vmatprep.subr.mxu0 0.0
      %262 = vmatpush1.msra.mxu0 0.0
      %263 = vmatprep.subr.mxu0 0.0
      %264 = vmatpush1.msra.mxu0 0.0
      %265 = vmatprep.subr.mxu0 0.0
      %266 = vmatpush1.msra.mxu0 0.0
      %267 = vmatprep.subr.mxu0 0.0
      %268 = vmatpush1.msra.mxu0 0.0
      %269 = vmatprep.subr.mxu0 0.0
      %270 = vmatpush1.msra.mxu0 0.0
      %271 = vmatprep.subr.mxu0 0.0
      %272 = vmatpush1.msra.mxu0 0.0
      %273 = vmatprep.subr.mxu0 0.0
      %274 = vmatpush1.msra.mxu0 0.0
      %275 = vmatprep.subr.mxu0 0.0
      %276 = vmatpush1.msra.mxu0 0.0
      %277 = vmatprep.subr.mxu0 0.0
      %278 = vmatpush1.msra.mxu0 0.0
      %279 = vmatprep.subr.mxu0 0.0
      %280 = vmatpush1.msra.mxu0 0.0
      %281 = vmatprep.subr.mxu0 0.0
      %282 = vmatpush1.msra.mxu0 0.0
      %283 = vmatprep.subr.mxu0 0.0
      %284 = vmatpush1.msra.mxu0 0.0
      %285 = vmatprep.subr.mxu0 0.0
      %286 = vmatpush1.msra.mxu0 0.0
      %287 = vmatprep.subr.mxu0 0.0
      %288 = vmatpush1.msra.mxu0 0.0
      %289 = vmatprep.subr.mxu0 0.0
      %290 = vmatpush1.msra.mxu0 0.0
      %291 = vmatprep.subr.mxu0 0.0
      %292 = vmatpush1.msra.mxu0 0.0
      %293 = vmatprep.subr.mxu0 0.0
      %294 = vmatpush1.msra.mxu0 0.0
      %295 = vmatprep.subr.mxu0 0.0
      %296 = vmatpush1.msra.mxu0 0.0
      %297 = vmatprep.subr.mxu0 0.0
      %298 = vmatpush1.msra.mxu0 0.0
      %299 = vmatprep.subr.mxu0 0.0
      %300 = vmatpush1.msra.mxu0 0.0
      %301 = vmatprep.mubr.f32.mxu0 0.0
      %302 = vmatmul.mubr.f32.gmra.mrb[0].mxu0 %v211
      %v303 = vpop.f32.mrb[0].mxu0
      %v304 = vadd.f32 0.0, %v303
      %v305 = vpop.f32.mrb[0].mxu0
      %306 = vmatprep.mubr.f32.mxu0 0.0
      %307 = vmatmul.mubr.f32.gmra.mrb[0].mxu0 %v214
      %v308 = vpop.f32.mrb[0].mxu0
      %v309 = vadd.f32 0.0, %v308
      %v310 = vpop.f32.mrb[0].mxu0
      %311 = vmatprep.mubr.f32.mxu0 0.0
      %312 = vmatmul.mubr.f32.gmra.mrb[0].mxu0 %v217
      %v313 = vpop.f32.mrb[0].mxu0
      %v314 = vadd.f32 0.0, %v313
      %v315 = vpop.f32.mrb[0].mxu0
      %316 = vmatprep.mubr.f32.mxu0 0.0
      %317 = vmatmul.mubr.f32.gmra.mrb[0].mxu0 %v220
      %v318 = vpop.f32.mrb[0].mxu0
      %v319 = vadd.f32 0.0, %v318
      %v320 = vpop.f32.mrb[0].mxu0
      %321 = vmatprep.mubr.f32.mxu0 0.0
      %322 = vmatmul.mubr.f32.gmra.mrb[0].mxu0 %v223
      %v323 = vpop.f32.mrb[0].mxu0
      %v324 = vadd.f32 0.0, %v323
      %v325 = vpop.f32.mrb[0].mxu0
      %326 = vmatprep.mubr.f32.mxu0 0.0
      %327 = vmatmul.mubr.f32.gmra.mrb[0].mxu0 %v226
      %v328 = vpop.f32.mrb[0].mxu0
      %v329 = vadd.f32 0.0, %v328
      %v330 = vpop.f32.mrb[0].mxu0
      %331 = vmatprep.mubr.f32.mxu0 0.0
      %332 = vmatmul.mubr.f32.gmra.mrb[0].mxu0 %v229
      %v333 = vpop.f32.mrb[0].mxu0
      %v334 = vadd.f32 0.0, %v333
      %v335 = vpop.f32.mrb[0].mxu0
      %336 = vmatprep.mubr.f32.mxu0 0.0
      %337 = vmatmul.mubr.f32.gmra.mrb[0].mxu0 %v232
      %v338 = vpop.f32.mrb[0].mxu0
      %v339 = vadd.f32 0.0, %v338
      %v340 = vpop.f32.mrb[0].mxu0
      %341 = vmatprep.mubr.f32.mxu0 0.0
      %342 = vmatmul.mubr.f32.gmra.mrb[0].mxu0 %v235
      %v343 = vpop.f32.mrb[0].mxu0
      %v344 = vadd.f32 0.0, %v343
      %v345 = vpop.f32.mrb[0].mxu0
      %346 = vdwg.mxu0
      %347 = vst [vmem:[#allocation2] sm:$0xff] %v304
      %348 = vst [vmem:[#allocation2 + $0x8] sm:$0xff] %v309
      %349 = vst [vmem:[#allocation2 + $0x10] sm:$0xff] %v314
      %350 = vst [vmem:[#allocation2 + $0x18] sm:$0xff] %v319
      %351 = vst [vmem:[#allocation2 + $0x20] sm:$0xff] %v324
      %352 = vst [vmem:[#allocation2 + $0x28] sm:$0xff] %v329
      %353 = vst [vmem:[#allocation2 + $0x30] sm:$0xff] %v334
      %354 = vst [vmem:[#allocation2 + $0x38] sm:$0xff] %v339
      %355 = vst [vmem:[#allocation2 + $0x40] sm:$0xff] %v344
      %v356 = vld [vmem:[#allocation2] sm:$0xff]
      %v357 = vld [vmem:[#allocation2 + $0x8] sm:$0xff]
      %v358 = vld [vmem:[#allocation2 + $0x10] sm:$0xff]
      %v359 = vld [vmem:[#allocation2 + $0x18] sm:$0xff]
      %v360 = vld [vmem:[#allocation2 + $0x20] sm:$0xff]
      %v361 = vld [vmem:[#allocation2 + $0x28] sm:$0xff]
      %v362 = vld [vmem:[#allocation2 + $0x30] sm:$0xff]
      %v363 = vld [vmem:[#allocation2 + $0x38] sm:$0xff]
      %v364 = vld [vmem:[#allocation2 + $0x40] sm:$0xff]
      %v365 = vld [vmem:[%s192 + $0x1] sm:$0xff]
      %v366 = vld [vmem:[%s192 + $0x9] sm:$0xff]
      %v367 = vld [vmem:[%s192 + $0x11] sm:$0xff]
      %v368 = vld [vmem:[%s192 + $0x19] sm:$0xff]
      %v369 = vld [vmem:[%s192 + $0x21] sm:$0xff]
      %v370 = vld [vmem:[%s192 + $0x29] sm:$0xff]
      %v371 = vld [vmem:[%s192 + $0x31] sm:$0xff]
      %v372 = vld [vmem:[%s192 + $0x39] sm:$0xff]
      %v373 = vld [vmem:[%s192 + $0x41] sm:$0xff]
      %s374 = scalar_lea.vmem %s1, 16
      %v375 = vld [vmem:[%s374] sm:$0xff]
      %v376 = vld [vmem:[%s374 + $0x8] sm:$0xff]
      %v378 = vsel %vm209, %v365, 0
      %v381 = vsel %vm209, %v366, 0
      %v384 = vsel %vm209, %v367, 0
      %v387 = vsel %vm209, %v368, 0
      %v390 = vsel %vm209, %v369, 0
      %v393 = vsel %vm209, %v370, 0
      %v396 = vsel %vm209, %v371, 0
      %v399 = vsel %vm209, %v372, 0
      %v402 = vsel %vm209, %v373, 0
      %404 = vmatprep.subr.mxu0 0.0
      %405 = vmatpush1.msra.mxu0 %v375
      %406 = vmatprep.subr.mxu0 0.0
      %407 = vmatpush1.msra.mxu0 %v376
      %408 = vmatprep.subr.mxu0 0.0
      %409 = vmatpush1.msra.mxu0 0.0
      %410 = vmatprep.subr.mxu0 0.0
      %411 = vmatpush1.msra.mxu0 0.0
      %412 = vmatprep.subr.mxu0 0.0
      %413 = vmatpush1.msra.mxu0 0.0
      %414 = vmatprep.subr.mxu0 0.0
      %415 = vmatpush1.msra.mxu0 0.0
      %416 = vmatprep.subr.mxu0 0.0
      %417 = vmatpush1.msra.mxu0 0.0
      %418 = vmatprep.subr.mxu0 0.0
      %419 = vmatpush1.msra.mxu0 0.0
      %420 = vmatprep.subr.mxu0 0.0
      %421 = vmatpush1.msra.mxu0 0.0
      %422 = vmatprep.subr.mxu0 0.0
      %423 = vmatpush1.msra.mxu0 0.0
      %424 = vmatprep.subr.mxu0 0.0
      %425 = vmatpush1.msra.mxu0 0.0
      %426 = vmatprep.subr.mxu0 0.0
      %427 = vmatpush1.msra.mxu0 0.0
      %428 = vmatprep.subr.mxu0 0.0
      %429 = vmatpush1.msra.mxu0 0.0
      %430 = vmatprep.subr.mxu0 0.0
      %431 = vmatpush1.msra.mxu0 0.0
      %432 = vmatprep.subr.mxu0 0.0
      %433 = vmatpush1.msra.mxu0 0.0
      %434 = vmatprep.subr.mxu0 0.0
      %435 = vmatpush1.msra.mxu0 0.0
      %436 = vmatprep.subr.mxu0 0.0
      %437 = vmatpush1.msra.mxu0 0.0
      %438 = vmatprep.subr.mxu0 0.0
      %439 = vmatpush1.msra.mxu0 0.0
      %440 = vmatprep.subr.mxu0 0.0
      %441 = vmatpush1.msra.mxu0 0.0
      %442 = vmatprep.subr.mxu0 0.0
      %443 = vmatpush1.msra.mxu0 0.0
      %444 = vmatprep.subr.mxu0 0.0
      %445 = vmatpush1.msra.mxu0 0.0
      %446 = vmatprep.subr.mxu0 0.0
      %447 = vmatpush1.msra.mxu0 0.0
      %448 = vmatprep.subr.mxu0 0.0
      %449 = vmatpush1.msra.mxu0 0.0
      %450 = vmatprep.subr.mxu0 0.0
      %451 = vmatpush1.msra.mxu0 0.0
      %452 = vmatprep.subr.mxu0 0.0
      %453 = vmatpush1.msra.mxu0 0.0
      %454 = vmatprep.subr.mxu0 0.0
      %455 = vmatpush1.msra.mxu0 0.0
      %456 = vmatprep.subr.mxu0 0.0
      %457 = vmatpush1.msra.mxu0 0.0
      %458 = vmatprep.subr.mxu0 0.0
      %459 = vmatpush1.msra.mxu0 0.0
      %460 = vmatprep.subr.mxu0 0.0
      %461 = vmatpush1.msra.mxu0 0.0
      %462 = vmatprep.subr.mxu0 0.0
      %463 = vmatpush1.msra.mxu0 0.0
      %464 = vmatprep.subr.mxu0 0.0
      %465 = vmatpush1.msra.mxu0 0.0
      %466 = vmatprep.subr.mxu0 0.0
      %467 = vmatpush1.msra.mxu0 0.0
      %468 = vmatprep.mubr.f32.mxu0 0.0
      %469 = vmatmul.mubr.f32.gmra.mrb[0].mxu0 %v378
      %v470 = vpop.f32.mrb[0].mxu0
      %v471 = vadd.f32 0.0, %v470
      %v472 = vpop.f32.mrb[0].mxu0
      %473 = vmatprep.mubr.f32.mxu0 0.0
      %474 = vmatmul.mubr.f32.gmra.mrb[0].mxu0 %v381
      %v475 = vpop.f32.mrb[0].mxu0
      %v476 = vadd.f32 0.0, %v475
      %v477 = vpop.f32.mrb[0].mxu0
      %478 = vmatprep.mubr.f32.mxu0 0.0
      %479 = vmatmul.mubr.f32.gmra.mrb[0].mxu0 %v384
      %v480 = vpop.f32.mrb[0].mxu0
      %v481 = vadd.f32 0.0, %v480
      %v482 = vpop.f32.mrb[0].mxu0
      %483 = vmatprep.mubr.f32.mxu0 0.0
      %484 = vmatmul.mubr.f32.gmra.mrb[0].mxu0 %v387
      %v485 = vpop.f32.mrb[0].mxu0
      %v486 = vadd.f32 0.0, %v485
      %v487 = vpop.f32.mrb[0].mxu0
      %488 = vmatprep.mubr.f32.mxu0 0.0
      %489 = vmatmul.mubr.f32.gmra.mrb[0].mxu0 %v390
      %v490 = vpop.f32.mrb[0].mxu0
      %v491 = vadd.f32 0.0, %v490
      %v492 = vpop.f32.mrb[0].mxu0
      %493 = vmatprep.mubr.f32.mxu0 0.0
      %494 = vmatmul.mubr.f32.gmra.mrb[0].mxu0 %v393
      %v495 = vpop.f32.mrb[0].mxu0
      %v496 = vadd.f32 0.0, %v495
      %v497 = vpop.f32.mrb[0].mxu0
      %498 = vmatprep.mubr.f32.mxu0 0.0
      %499 = vmatmul.mubr.f32.gmra.mrb[0].mxu0 %v396
      %v500 = vpop.f32.mrb[0].mxu0
      %v501 = vadd.f32 0.0, %v500
      %v502 = vpop.f32.mrb[0].mxu0
      %503 = vmatprep.mubr.f32.mxu0 0.0
      %504 = vmatmul.mubr.f32.gmra.mrb[0].mxu0 %v399
      %v505 = vpop.f32.mrb[0].mxu0
      %v506 = vadd.f32 0.0, %v505
      %v507 = vpop.f32.mrb[0].mxu0
      %508 = vmatprep.mubr.f32.mxu0 0.0
      %509 = vmatmul.mubr.f32.gmra.mrb[0].mxu0 %v402
      %v510 = vpop.f32.mrb[0].mxu0
      %v511 = vadd.f32 0.0, %v510
      %v512 = vpop.f32.mrb[0].mxu0
      %513 = vdwg.mxu0
      %v514 = vadd.f32 %v356, %v471
      %v515 = vadd.f32 %v357, %v476
      %v516 = vadd.f32 %v358, %v481
      %v517 = vadd.f32 %v359, %v486
      %v518 = vadd.f32 %v360, %v491
      %v519 = vadd.f32 %v361, %v496
      %v520 = vadd.f32 %v362, %v501
      %v521 = vadd.f32 %v363, %v506
      %v522 = vadd.f32 %v364, %v511
      %523 = vst [vmem:[#allocation2] sm:$0xff] %v514
      %524 = vst [vmem:[#allocation2 + $0x8] sm:$0xff] %v515
      %525 = vst [vmem:[#allocation2 + $0x10] sm:$0xff] %v516
      %526 = vst [vmem:[#allocation2 + $0x18] sm:$0xff] %v517
      %527 = vst [vmem:[#allocation2 + $0x20] sm:$0xff] %v518
      %528 = vst [vmem:[#allocation2 + $0x28] sm:$0xff] %v519
      %529 = vst [vmem:[#allocation2 + $0x30] sm:$0xff] %v520
      %530 = vst [vmem:[#allocation2 + $0x38] sm:$0xff] %v521
      %531 = vst [vmem:[#allocation2 + $0x40] sm:$0xff] %v522
      %v532 = vld [vmem:[#allocation2] sm:$0xff]
      %v533 = vld [vmem:[#allocation2 + $0x8] sm:$0xff]
      %v534 = vld [vmem:[#allocation2 + $0x10] sm:$0xff]
      %v535 = vld [vmem:[#allocation2 + $0x18] sm:$0xff]
      %v536 = vld [vmem:[#allocation2 + $0x20] sm:$0xff]
      %v537 = vld [vmem:[#allocation2 + $0x28] sm:$0xff]
      %v538 = vld [vmem:[#allocation2 + $0x30] sm:$0xff]
      %v539 = vld [vmem:[#allocation2 + $0x38] sm:$0xff]
      %v540 = vld [vmem:[#allocation2 + $0x40] sm:$0xff]
      %v541 = vld [vmem:[%s192 + $0x9] sm:$0xff]
      %v542 = vld [vmem:[%s192 + $0x11] sm:$0xff]
      %v543 = vld [vmem:[%s192 + $0x19] sm:$0xff]
      %v544 = vld [vmem:[%s192 + $0x21] sm:$0xff]
      %v545 = vld [vmem:[%s192 + $0x29] sm:$0xff]
      %v546 = vld [vmem:[%s192 + $0x31] sm:$0xff]
      %v547 = vld [vmem:[%s192 + $0x39] sm:$0xff]
      %v548 = vld [vmem:[%s192 + $0x41] sm:$0xff]
      %v549 = vld [vmem:[%s192 + $0x49] sm:$0xff]
      %s550 = scalar_lea.vmem %s1, 32
      %v551 = vld [vmem:[%s550] sm:$0xff]
      %v552 = vld [vmem:[%s550 + $0x8] sm:$0xff]
      %v554 = vsel %vm209, %v541, 0
      %v557 = vsel %vm209, %v542, 0
      %v560 = vsel %vm209, %v543, 0
      %v563 = vsel %vm209, %v544, 0
      %v566 = vsel %vm209, %v545, 0
      %v569 = vsel %vm209, %v546, 0
      %v572 = vsel %vm209, %v547, 0
      %v575 = vsel %vm209, %v548, 0
      %v578 = vsel %vm209, %v549, 0
      %580 = vmatprep.subr.mxu0 0.0
      %581 = vmatpush1.msra.mxu0 %v551
      %582 = vmatprep.subr.mxu0 0.0
      %583 = vmatpush1.msra.mxu0 %v552
      %584 = vmatprep.subr.mxu0 0.0
      %585 = vmatpush1.msra.mxu0 0.0
      %586 = vmatprep.subr.mxu0 0.0
      %587 = vmatpush1.msra.mxu0 0.0
      %588 = vmatprep.subr.mxu0 0.0
      %589 = vmatpush1.msra.mxu0 0.0
      %590 = vmatprep.subr.mxu0 0.0
      %591 = vmatpush1.msra.mxu0 0.0
      %592 = vmatprep.subr.mxu0 0.0
      %593 = vmatpush1.msra.mxu0 0.0
      %594 = vmatprep.subr.mxu0 0.0
      %595 = vmatpush1.msra.mxu0 0.0
      %596 = vmatprep.subr.mxu0 0.0
      %597 = vmatpush1.msra.mxu0 0.0
      %598 = vmatprep.subr.mxu0 0.0
      %599 = vmatpush1.msra.mxu0 0.0
      %600 = vmatprep.subr.mxu0 0.0
      %601 = vmatpush1.msra.mxu0 0.0
      %602 = vmatprep.subr.mxu0 0.0
      %603 = vmatpush1.msra.mxu0 0.0
      %604 = vmatprep.subr.mxu0 0.0
      %605 = vmatpush1.msra.mxu0 0.0
      %606 = vmatprep.subr.mxu0 0.0
      %607 = vmatpush1.msra.mxu0 0.0
      %608 = vmatprep.subr.mxu0 0.0
      %609 = vmatpush1.msra.mxu0 0.0
      %610 = vmatprep.subr.mxu0 0.0
      %611 = vmatpush1.msra.mxu0 0.0
      %612 = vmatprep.subr.mxu0 0.0
      %613 = vmatpush1.msra.mxu0 0.0
      %614 = vmatprep.subr.mxu0 0.0
      %615 = vmatpush1.msra.mxu0 0.0
      %616 = vmatprep.subr.mxu0 0.0
      %617 = vmatpush1.msra.mxu0 0.0
      %618 = vmatprep.subr.mxu0 0.0
      %619 = vmatpush1.msra.mxu0 0.0
      %620 = vmatprep.subr.mxu0 0.0
      %621 = vmatpush1.msra.mxu0 0.0
      %622 = vmatprep.subr.mxu0 0.0
      %623 = vmatpush1.msra.mxu0 0.0
      %624 = vmatprep.subr.mxu0 0.0
      %625 = vmatpush1.msra.mxu0 0.0
      %626 = vmatprep.subr.mxu0 0.0
      %627 = vmatpush1.msra.mxu0 0.0
      %628 = vmatprep.subr.mxu0 0.0
      %629 = vmatpush1.msra.mxu0 0.0
      %630 = vmatprep.subr.mxu0 0.0
      %631 = vmatpush1.msra.mxu0 0.0
      %632 = vmatprep.subr.mxu0 0.0
      %633 = vmatpush1.msra.mxu0 0.0
      %634 = vmatprep.subr.mxu0 0.0
      %635 = vmatpush1.msra.mxu0 0.0
      %636 = vmatprep.subr.mxu0 0.0
      %637 = vmatpush1.msra.mxu0 0.0
      %638 = vmatprep.subr.mxu0 0.0
      %639 = vmatpush1.msra.mxu0 0.0
      %640 = vmatprep.subr.mxu0 0.0
      %641 = vmatpush1.msra.mxu0 0.0
      %642 = vmatprep.subr.mxu0 0.0
      %643 = vmatpush1.msra.mxu0 0.0
      %644 = vmatprep.mubr.f32.mxu0 0.0
      %645 = vmatmul.mubr.f32.gmra.mrb[0].mxu0 %v554
      %v646 = vpop.f32.mrb[0].mxu0
      %v647 = vadd.f32 0.0, %v646
      %v648 = vpop.f32.mrb[0].mxu0
      %649 = vmatprep.mubr.f32.mxu0 0.0
      %650 = vmatmul.mubr.f32.gmra.mrb[0].mxu0 %v557
      %v651 = vpop.f32.mrb[0].mxu0
      %v652 = vadd.f32 0.0, %v651
      %v653 = vpop.f32.mrb[0].mxu0
      %654 = vmatprep.mubr.f32.mxu0 0.0
      %655 = vmatmul.mubr.f32.gmra.mrb[0].mxu0 %v560
      %v656 = vpop.f32.mrb[0].mxu0
      %v657 = vadd.f32 0.0, %v656
      %v658 = vpop.f32.mrb[0].mxu0
      %659 = vmatprep.mubr.f32.mxu0 0.0
      %660 = vmatmul.mubr.f32.gmra.mrb[0].mxu0 %v563
      %v661 = vpop.f32.mrb[0].mxu0
      %v662 = vadd.f32 0.0, %v661
      %v663 = vpop.f32.mrb[0].mxu0
      %664 = vmatprep.mubr.f32.mxu0 0.0
      %665 = vmatmul.mubr.f32.gmra.mrb[0].mxu0 %v566
      %v666 = vpop.f32.mrb[0].mxu0
      %v667 = vadd.f32 0.0, %v666
      %v668 = vpop.f32.mrb[0].mxu0
      %669 = vmatprep.mubr.f32.mxu0 0.0
      %670 = vmatmul.mubr.f32.gmra.mrb[0].mxu0 %v569
      %v671 = vpop.f32.mrb[0].mxu0
      %v672 = vadd.f32 0.0, %v671
      %v673 = vpop.f32.mrb[0].mxu0
      %674 = vmatprep.mubr.f32.mxu0 0.0
      %675 = vmatmul.mubr.f32.gmra.mrb[0].mxu0 %v572
      %v676 = vpop.f32.mrb[0].mxu0
      %v677 = vadd.f32 0.0, %v676
      %v678 = vpop.f32.mrb[0].mxu0
      %679 = vmatprep.mubr.f32.mxu0 0.0
      %680 = vmatmul.mubr.f32.gmra.mrb[0].mxu0 %v575
      %v681 = vpop.f32.mrb[0].mxu0
      %v682 = vadd.f32 0.0, %v681
      %v683 = vpop.f32.mrb[0].mxu0
      %684 = vmatprep.mubr.f32.mxu0 0.0
      %685 = vmatmul.mubr.f32.gmra.mrb[0].mxu0 %v578
      %v686 = vpop.f32.mrb[0].mxu0
      %v687 = vadd.f32 0.0, %v686
      %v688 = vpop.f32.mrb[0].mxu0
      %689 = vdwg.mxu0
      %v690 = vadd.f32 %v532, %v647
      %v691 = vadd.f32 %v533, %v652
      %v692 = vadd.f32 %v534, %v657
      %v693 = vadd.f32 %v535, %v662
      %v694 = vadd.f32 %v536, %v667
      %v695 = vadd.f32 %v537, %v672
      %v696 = vadd.f32 %v538, %v677
      %v697 = vadd.f32 %v539, %v682
      %v698 = vadd.f32 %v540, %v687
      %699 = vst [vmem:[#allocation2] sm:$0xff] %v690
      %700 = vst [vmem:[#allocation2 + $0x8] sm:$0xff] %v691
      %701 = vst [vmem:[#allocation2 + $0x10] sm:$0xff] %v692
      %702 = vst [vmem:[#allocation2 + $0x18] sm:$0xff] %v693
      %703 = vst [vmem:[#allocation2 + $0x20] sm:$0xff] %v694
      %704 = vst [vmem:[#allocation2 + $0x28] sm:$0xff] %v695
      %705 = vst [vmem:[#allocation2 + $0x30] sm:$0xff] %v696
      %706 = vst [vmem:[#allocation2 + $0x38] sm:$0xff] %v697
      %707 = vst [vmem:[#allocation2 + $0x40] sm:$0xff] %v698
      %v708 = vld [vmem:[#allocation2] sm:$0xff]
      %v709 = vld [vmem:[#allocation2 + $0x8] sm:$0xff]
      %v710 = vld [vmem:[#allocation2 + $0x10] sm:$0xff]
      %v711 = vld [vmem:[#allocation2 + $0x18] sm:$0xff]
      %v712 = vld [vmem:[#allocation2 + $0x20] sm:$0xff]
      %v713 = vld [vmem:[#allocation2 + $0x28] sm:$0xff]
      %v714 = vld [vmem:[#allocation2 + $0x30] sm:$0xff]
      %v715 = vld [vmem:[#allocation2 + $0x38] sm:$0xff]
      %v716 = vld [vmem:[#allocation2 + $0x40] sm:$0xff]
      %v717 = vld [vmem:[%s192 + $0xa] sm:$0xff]
      %v718 = vld [vmem:[%s192 + $0x12] sm:$0xff]
      %v719 = vld [vmem:[%s192 + $0x1a] sm:$0xff]
      %v720 = vld [vmem:[%s192 + $0x22] sm:$0xff]
      %v721 = vld [vmem:[%s192 + $0x2a] sm:$0xff]
      %v722 = vld [vmem:[%s192 + $0x32] sm:$0xff]
      %v723 = vld [vmem:[%s192 + $0x3a] sm:$0xff]
      %v724 = vld [vmem:[%s192 + $0x42] sm:$0xff]
      %v725 = vld [vmem:[%s192 + $0x4a] sm:$0xff]
      %s726 = scalar_lea.vmem %s1, 48
      %v727 = vld [vmem:[%s726] sm:$0xff]
      %v728 = vld [vmem:[%s726 + $0x8] sm:$0xff]
      %v730 = vsel %vm209, %v717, 0
      %v733 = vsel %vm209, %v718, 0
      %v736 = vsel %vm209, %v719, 0
      %v739 = vsel %vm209, %v720, 0
      %v742 = vsel %vm209, %v721, 0
      %v745 = vsel %vm209, %v722, 0
      %v748 = vsel %vm209, %v723, 0
      %v751 = vsel %vm209, %v724, 0
      %v754 = vsel %vm209, %v725, 0
      %756 = vmatprep.subr.mxu0 0.0
      %757 = vmatpush1.msra.mxu0 %v727
      %758 = vmatprep.subr.mxu0 0.0
      %759 = vmatpush1.msra.mxu0 %v728
      %760 = vmatprep.subr.mxu0 0.0
      %761 = vmatpush1.msra.mxu0 0.0
      %762 = vmatprep.subr.mxu0 0.0
      %763 = vmatpush1.msra.mxu0 0.0
      %764 = vmatprep.subr.mxu0 0.0
      %765 = vmatpush1.msra.mxu0 0.0
      %766 = vmatprep.subr.mxu0 0.0
      %767 = vmatpush1.msra.mxu0 0.0
      %768 = vmatprep.subr.mxu0 0.0
      %769 = vmatpush1.msra.mxu0 0.0
      %770 = vmatprep.subr.mxu0 0.0
      %771 = vmatpush1.msra.mxu0 0.0
      %772 = vmatprep.subr.mxu0 0.0
      %773 = vmatpush1.msra.mxu0 0.0
      %774 = vmatprep.subr.mxu0 0.0
      %775 = vmatpush1.msra.mxu0 0.0
      %776 = vmatprep.subr.mxu0 0.0
      %777 = vmatpush1.msra.mxu0 0.0
      %778 = vmatprep.subr.mxu0 0.0
      %779 = vmatpush1.msra.mxu0 0.0
      %780 = vmatprep.subr.mxu0 0.0
      %781 = vmatpush1.msra.mxu0 0.0
      %782 = vmatprep.subr.mxu0 0.0
      %783 = vmatpush1.msra.mxu0 0.0
      %784 = vmatprep.subr.mxu0 0.0
      %785 = vmatpush1.msra.mxu0 0.0
      %786 = vmatprep.subr.mxu0 0.0
      %787 = vmatpush1.msra.mxu0 0.0
      %788 = vmatprep.subr.mxu0 0.0
      %789 = vmatpush1.msra.mxu0 0.0
      %790 = vmatprep.subr.mxu0 0.0
      %791 = vmatpush1.msra.mxu0 0.0
      %792 = vmatprep.subr.mxu0 0.0
      %793 = vmatpush1.msra.mxu0 0.0
      %794 = vmatprep.subr.mxu0 0.0
      %795 = vmatpush1.msra.mxu0 0.0
      %796 = vmatprep.subr.mxu0 0.0
      %797 = vmatpush1.msra.mxu0 0.0
      %798 = vmatprep.subr.mxu0 0.0
      %799 = vmatpush1.msra.mxu0 0.0
      %800 = vmatprep.subr.mxu0 0.0
      %801 = vmatpush1.msra.mxu0 0.0
      %802 = vmatprep.subr.mxu0 0.0
      %803 = vmatpush1.msra.mxu0 0.0
      %804 = vmatprep.subr.mxu0 0.0
      %805 = vmatpush1.msra.mxu0 0.0
      %806 = vmatprep.subr.mxu0 0.0
      %807 = vmatpush1.msra.mxu0 0.0
      %808 = vmatprep.subr.mxu0 0.0
      %809 = vmatpush1.msra.mxu0 0.0
      %810 = vmatprep.subr.mxu0 0.0
      %811 = vmatpush1.msra.mxu0 0.0
      %812 = vmatprep.subr.mxu0 0.0
      %813 = vmatpush1.msra.mxu0 0.0
      %814 = vmatprep.subr.mxu0 0.0
      %815 = vmatpush1.msra.mxu0 0.0
      %816 = vmatprep.subr.mxu0 0.0
      %817 = vmatpush1.msra.mxu0 0.0
      %818 = vmatprep.subr.mxu0 0.0
      %819 = vmatpush1.msra.mxu0 0.0
      %820 = vmatprep.mubr.f32.mxu0 0.0
      %821 = vmatmul.mubr.f32.gmra.mrb[0].mxu0 %v730
      %v822 = vpop.f32.mrb[0].mxu0
      %v823 = vadd.f32 0.0, %v822
      %v824 = vpop.f32.mrb[0].mxu0
      %825 = vmatprep.mubr.f32.mxu0 0.0
      %826 = vmatmul.mubr.f32.gmra.mrb[0].mxu0 %v733
      %v827 = vpop.f32.mrb[0].mxu0
      %v828 = vadd.f32 0.0, %v827
      %v829 = vpop.f32.mrb[0].mxu0
      %830 = vmatprep.mubr.f32.mxu0 0.0
      %831 = vmatmul.mubr.f32.gmra.mrb[0].mxu0 %v736
      %v832 = vpop.f32.mrb[0].mxu0
      %v833 = vadd.f32 0.0, %v832
      %v834 = vpop.f32.mrb[0].mxu0
      %835 = vmatprep.mubr.f32.mxu0 0.0
      %836 = vmatmul.mubr.f32.gmra.mrb[0].mxu0 %v739
      %v837 = vpop.f32.mrb[0].mxu0
      %v838 = vadd.f32 0.0, %v837
      %v839 = vpop.f32.mrb[0].mxu0
      %840 = vmatprep.mubr.f32.mxu0 0.0
      %841 = vmatmul.mubr.f32.gmra.mrb[0].mxu0 %v742
      %v842 = vpop.f32.mrb[0].mxu0
      %v843 = vadd.f32 0.0, %v842
      %v844 = vpop.f32.mrb[0].mxu0
      %845 = vmatprep.mubr.f32.mxu0 0.0
      %846 = vmatmul.mubr.f32.gmra.mrb[0].mxu0 %v745
      %v847 = vpop.f32.mrb[0].mxu0
      %v848 = vadd.f32 0.0, %v847
      %v849 = vpop.f32.mrb[0].mxu0
      %850 = vmatprep.mubr.f32.mxu0 0.0
      %851 = vmatmul.mubr.f32.gmra.mrb[0].mxu0 %v748
      %v852 = vpop.f32.mrb[0].mxu0
      %v853 = vadd.f32 0.0, %v852
      %v854 = vpop.f32.mrb[0].mxu0
      %855 = vmatprep.mubr.f32.mxu0 0.0
      %856 = vmatmul.mubr.f32.gmra.mrb[0].mxu0 %v751
      %v857 = vpop.f32.mrb[0].mxu0
      %v858 = vadd.f32 0.0, %v857
      %v859 = vpop.f32.mrb[0].mxu0
      %860 = vmatprep.mubr.f32.mxu0 0.0
      %861 = vmatmul.mubr.f32.gmra.mrb[0].mxu0 %v754
      %v862 = vpop.f32.mrb[0].mxu0
      %v863 = vadd.f32 0.0, %v862
      %v864 = vpop.f32.mrb[0].mxu0
      %865 = vdwg.mxu0
      %v866 = vadd.f32 %v708, %v823
      %v867 = vadd.f32 %v709, %v828
      %v868 = vadd.f32 %v710, %v833
      %v869 = vadd.f32 %v711, %v838
      %v870 = vadd.f32 %v712, %v843
      %v871 = vadd.f32 %v713, %v848
      %v872 = vadd.f32 %v714, %v853
      %v873 = vadd.f32 %v715, %v858
      %v874 = vadd.f32 %v716, %v863
      %875 = vst [vmem:[#allocation2] sm:$0xff] %v866
      %876 = vst [vmem:[#allocation2 + $0x8] sm:$0xff] %v867
      %877 = vst [vmem:[#allocation2 + $0x10] sm:$0xff] %v868
      %878 = vst [vmem:[#allocation2 + $0x18] sm:$0xff] %v869
      %879 = vst [vmem:[#allocation2 + $0x20] sm:$0xff] %v870
      %880 = vst [vmem:[#allocation2 + $0x28] sm:$0xff] %v871
      %881 = vst [vmem:[#allocation2 + $0x30] sm:$0xff] %v872
      %882 = vst [vmem:[#allocation2 + $0x38] sm:$0xff] %v873
      %883 = vst [vmem:[#allocation2 + $0x40] sm:$0xff] %v874
      %v884 = vld [vmem:[#allocation2] sm:$0xff]
      %v885 = vld [vmem:[#allocation2 + $0x8] sm:$0xff]
      %v886 = vld [vmem:[#allocation2 + $0x10] sm:$0xff]
      %v887 = vld [vmem:[#allocation2 + $0x18] sm:$0xff]
      %v888 = vld [vmem:[#allocation2 + $0x20] sm:$0xff]
      %v889 = vld [vmem:[#allocation2 + $0x28] sm:$0xff]
      %v890 = vld [vmem:[#allocation2 + $0x30] sm:$0xff]
      %v891 = vld [vmem:[#allocation2 + $0x38] sm:$0xff]
      %v892 = vld [vmem:[#allocation2 + $0x40] sm:$0xff]
      %v893 = vld [vmem:[%s2] sm:$0x1]
      %v895 = vlaneseq
      %v896 = vshrl.u32 %v895, 7
      %v897 = vsub.s32 0, %v896
      %v898 = vrot.slane %v893, %v897
      %v900 = vmul.f32 %v884, %v898
      %v901 = vmul.f32 %v885, %v898
      %v902 = vmul.f32 %v886, %v898
      %v903 = vmul.f32 %v887, %v898
      %v904 = vmul.f32 %v888, %v898
      %v905 = vmul.f32 %v889, %v898
      %v906 = vmul.f32 %v890, %v898
      %v907 = vmul.f32 %v891, %v898
      %v908 = vmul.f32 %v892, %v898
      %v909 = vld [vmem:[%s3] sm:$0x1]
      %v911 = vlaneseq
      %v912 = vshrl.u32 %v911, 7
      %v913 = vsub.s32 0, %v912
      %v914 = vrot.slane %v909, %v913
      %v916 = vadd.f32 %v900, %v914
      %v917 = vadd.f32 %v901, %v914
      %v918 = vadd.f32 %v902, %v914
      %v919 = vadd.f32 %v903, %v914
      %v920 = vadd.f32 %v904, %v914
      %v921 = vadd.f32 %v905, %v914
      %v922 = vadd.f32 %v906, %v914
      %v923 = vadd.f32 %v907, %v914
      %v924 = vadd.f32 %v908, %v914
      %v925 = vmax.f32 %v916, 0.0
      %v926 = vmax.f32 %v917, 0.0
      %v927 = vmax.f32 %v918, 0.0
      %v928 = vmax.f32 %v919, 0.0
      %v929 = vmax.f32 %v920, 0.0
      %v930 = vmax.f32 %v921, 0.0
      %v931 = vmax.f32 %v922, 0.0
      %v932 = vmax.f32 %v923, 0.0
      %v933 = vmax.f32 %v924, 0.0
      %vm934 = vcmask 261120
      %935 = vst.msk [vmem:[%s197] sm:$0xff] %vm934, %v925
      %936 = vst.msk [vmem:[%s197 + $0x8] sm:$0xff] %vm934, %v926
      %937 = vst.msk [vmem:[%s197 + $0x10] sm:$0xff] %vm934, %v927
      %938 = vst.msk [vmem:[%s197 + $0x18] sm:$0xff] %vm934, %v928
      %939 = vst.msk [vmem:[%s197 + $0x20] sm:$0xff] %vm934, %v929
      %940 = vst.msk [vmem:[%s197 + $0x28] sm:$0xff] %vm934, %v930
      %941 = vst.msk [vmem:[%s197 + $0x30] sm:$0xff] %vm934, %v931
      %942 = vst.msk [vmem:[%s197 + $0x38] sm:$0xff] %vm934, %v932
      %943 = vst.msk [vmem:[%s197 + $0x40] sm:$0xff] %vm934, %v933
      %p944 = scmp.lt.s32.totalorder %s15, 1
      %s945 = scalar_select %p944, %s15, 1
      %s946 = smul.addr %s945, 9
      %s947 = smul.addr %s946, 8
      %s948 = scalar_lea.vmem %s4, %s947
      // Predicated region
      $region37: #{_lambda_.2} parent=35 // pred_check
        %p949 = pneg %p122
      $region38: #{_lambda_.2} parent=35 // pred_check_branch
        %951 = sbr.rel (%p949) target = $region40
      $region39: #{_lambda_.2} parent=35 // pred_region
        _
      $region40: #{_lambda_.2} parent=35 // pred_fallthru
        _
    $region36: #{_lambda_.2} parent=5 // pred_fallthru
      _
    %p952 = scmp.le.s32.totalorder 2, %s10
    // Predicated region
    $region41: #{_lambda_.2} parent=5 // pred_check
      %p953 = pneg %p952
    $region42: #{_lambda_.2} parent=5 // pred_check_branch
      %955 = sbr.rel (%p953) target = $region44
    $region43: #{_lambda_.2} parent=5 // pred_region
      %s956 = ssub.s32 %s10, 2
      // Predicated region
      $region45: #{_lambda_.2} parent=43 // pred_check
        %p957 = pneg %p128
      $region46: #{_lambda_.2} parent=43 // pred_check_branch
        %959 = sbr.rel (%p957) target = $region48
      $region47: #{_lambda_.2} parent=43 // pred_region
        %p960 = scmp.lt.s32.totalorder %s16, 1
        %s961 = scalar_select %p960, %s16, 1
        %s962 = smul.addr %s961, 9
        %s963 = smul.addr %s962, 8
        %s964 = scalar_lea.vmem %s4, %s963
      $region48: #{_lambda_.2} parent=43 // pred_fallthru
        _
    $region44: #{_lambda_.2} parent=5 // pred_fallthru
      _
  $region6: #{_lambda_.2} parent=0 // loop_footer
    %s14 = sadd.s32 1, %s10
  $region7: #{_lambda_.2} parent=0 // loop_footer_branch
    %9 = sbr.rel target = $region3
  $region8: #{_lambda_.2} parent=0 // loop_exit
    _

// kernel: _lambda_.3
$region0: #{_lambda_.3}
  #allocation0 [shape = 'u32[]', space=smem, size = 0x4, offset = 0x4, fixed_abs, tag = 'smem constant byte address 0x4 - core index']
  #allocation1 [shape = 'u32[144,128]{1,0:T(1,128)}', space=vmem, size = 0x12000, scoped, tag = 'internal scratch']
  #allocation2 [shape = 'f32[20,128]{1,0:T(8,128)}', space=vmem, size = 0x3000, scoped, tag = 'scratch operand']
  %s0 = inlined_call_operand.vmem [shape: f32[2,30,128], index: 0, kind: input, shape index: {}]
  %s1 = inlined_call_operand.vmem [shape: f32[4,128,128], index: 1, kind: input, shape index: {}]
  %s2 = inlined_call_operand.vmem [shape: f32[1,128], index: 2, kind: input, shape index: {}]
  %s3 = inlined_call_operand.vmem [shape: f32[1,128], index: 3, kind: input, shape index: {}]
  %s4 = inlined_call_operand.vmem [shape: f32[2,20,64], index: 4, kind: output, shape index: {}]
  %s5 = sld [smem:[#allocation0]]
  $region49: #{_lambda_.3} parent=0
    _
  %s7 = ssub.s32 1, %s5
  %s8 = scalar_select 0, %s7, %s5
  loop: start=0, step=1, limit=4
  $region2: #{_lambda_.3} parent=0 // loop_pre_header
    _
  $region3: #{_lambda_.3} parent=0 // loop_header
    %s10 = sphi 0, %s14
    %p11 = scmp.ge.s32.totalorder %s10, 4
    %s20 = sphi 0, %s22
    %s23 = sphi 0, %s20
    %s24 = sphi 0, %s23
    %s40 = sphi 0, %s24
    %s44 = sphi 0, %s44
    %s46 = sphi 0, %s44
    %s47 = sphi 0, %s46
    %s61 = sphi 0, %s47
    %s65 = sphi 0, %s65
    %s67 = sphi 0, %s65
    %s68 = sphi 0, %s67
    %s82 = sphi 0, %s68
    %s86 = sphi 0, %s86
    %s88 = sphi 0, %s86
    %s89 = sphi 0, %s88
    %s103 = sphi 0, %s89
    %s109 = sphi 0, %s111
    %s112 = sphi 0, %s109
    %s113 = sphi 0, %s112
    %s129 = sphi 0, %s113
  $region4: #{_lambda_.3} parent=0 // loop_header_branch
    %13 = sbr.rel (%p11) target = $region8
  $region5: #{_lambda_.3} parent=0 // loop_body
    %s15 = ssub.s32 %s10, 1
    %s16 = ssub.s32 %s10, 2
    %s17 = sadd.s32 %s10, 1
    %s18 = ssub.s32 %s10, %s17
    %p19 = scmp.eq.s32.totalorder %s18, 0
    %s21 = sadd.s32 %s20, 1
    %s22 = scalar_select %p19, %s20, %s21
    %p25 = pneg %p19
    %p26 = scmp.eq.s32.totalorder %s10, 1
    %p27 = por %p25, %p26
    %p28 = scmp.ne.s32.totalorder %s20, %s23
    %p29 = scmp.eq.s32.totalorder %s10, 0
    %p30 = por %p28, %p29
    %p31 = scmp.ne.s32.totalorder %s20, %s23
    %p32 = scmp.eq.s32.totalorder %s15, 1
    %p33 = por %p31, %p32
    %p34 = scmp.ne.s32.totalorder %s23, %s24
    %p35 = scmp.eq.s32.totalorder %s15, 0
    %p36 = por %p34, %p35
    %p37 = scmp.ne.s32.totalorder %s23, %s24
    %p38 = scmp.eq.s32.totalorder %s16, 1
    %p39 = por %p37, %p38
    %p41 = scmp.ne.s32.totalorder %s24, %s40
    %p42 = scmp.eq.s32.totalorder %s16, 0
    %p43 = por %p41, %p42
    %s45 = sadd.s32 %s44, 1
    %p48 = scmp.eq.s32.totalorder %s10, 1
    %p49 = scmp.ne.s32.totalorder %s44, %s46
    %p50 = scmp.eq.s32.totalorder %s10, 0
    %p51 = por %p49, %p50
    %p52 = scmp.ne.s32.totalorder %s44, %s46
    %p53 = scmp.eq.s32.totalorder %s15, 1
    %p54 = por %p52, %p53
    %p55 = scmp.ne.s32.totalorder %s46, %s47
    %p56 = scmp.eq.s32.totalorder %s15, 0
    %p57 = por %p55, %p56
    %p58 = scmp.ne.s32.totalorder %s46, %s47
    %p59 = scmp.eq.s32.totalorder %s16, 1
    %p60 = por %p58, %p59
    %p62 = scmp.ne.s32.totalorder %s47, %s61
    %p63 = scmp.eq.s32.totalorder %s16, 0
    %p64 = por %p62, %p63
    %s66 = sadd.s32 %s65, 1
    %p69 = scmp.eq.s32.totalorder %s10, 1
    %p70 = scmp.ne.s32.totalorder %s65, %s67
    %p71 = scmp.eq.s32.totalorder %s10, 0
    %p72 = por %p70, %p71
    %p73 = scmp.ne.s32.totalorder %s65, %s67
    %p74 = scmp.eq.s32.totalorder %s15, 1
    %p75 = por %p73, %p74
    %p76 = scmp.ne.s32.totalorder %s67, %s68
    %p77 = scmp.eq.s32.totalorder %s15, 0
    %p78 = por %p76, %p77
    %p79 = scmp.ne.s32.totalorder %s67, %s68
    %p80 = scmp.eq.s32.totalorder %s16, 1
    %p81 = por %p79, %p80
    %p83 = scmp.ne.s32.totalorder %s68, %s82
    %p84 = scmp.eq.s32.totalorder %s16, 0
    %p85 = por %p83, %p84
    %s87 = sadd.s32 %s86, 1
    %p90 = scmp.eq.s32.totalorder %s10, 1
    %p91 = scmp.ne.s32.totalorder %s86, %s88
    %p92 = scmp.eq.s32.totalorder %s10, 0
    %p93 = por %p91, %p92
    %p94 = scmp.ne.s32.totalorder %s86, %s88
    %p95 = scmp.eq.s32.totalorder %s15, 1
    %p96 = por %p94, %p95
    %p97 = scmp.ne.s32.totalorder %s88, %s89
    %p98 = scmp.eq.s32.totalorder %s15, 0
    %p99 = por %p97, %p98
    %p100 = scmp.ne.s32.totalorder %s88, %s89
    %p101 = scmp.eq.s32.totalorder %s16, 1
    %p102 = por %p100, %p101
    %p104 = scmp.ne.s32.totalorder %s89, %s103
    %p105 = scmp.eq.s32.totalorder %s16, 0
    %p106 = por %p104, %p105
    %s107 = ssub.s32 %s10, %s17
    %p108 = scmp.eq.s32.totalorder %s107, 0
    %s110 = sadd.s32 %s109, 1
    %s111 = scalar_select %p108, %s109, %s110
    %p114 = pneg %p108
    %p115 = scmp.eq.s32.totalorder %s10, 1
    %p116 = por %p114, %p115
    %p117 = scmp.ne.s32.totalorder %s109, %s112
    %p118 = scmp.eq.s32.totalorder %s10, 0
    %p119 = por %p117, %p118
    %p120 = scmp.ne.s32.totalorder %s109, %s112
    %p121 = scmp.eq.s32.totalorder %s15, 1
    %p122 = por %p120, %p121
    %p123 = scmp.ne.s32.totalorder %s112, %s113
    %p124 = scmp.eq.s32.totalorder %s15, 0
    %p125 = por %p123, %p124
    %p126 = scmp.ne.s32.totalorder %s112, %s113
    %p127 = scmp.eq.s32.totalorder %s16, 1
    %p128 = por %p126, %p127
    %p130 = scmp.ne.s32.totalorder %s113, %s129
    %p131 = scmp.eq.s32.totalorder %s16, 0
    %p132 = por %p130, %p131
    %p133 = scmp.le.s32.totalorder 1, %s10
    %p134 = scmp.lt.s32.totalorder %s10, 3
    %p135 = pnand %p133, %p134
    %p136 = pneg %p135
    // Predicated region
    $region9: #{_lambda_.3} parent=5 // pred_check
      _
    $region10: #{_lambda_.3} parent=5 // pred_check_branch
      %138 = sbr.rel (%p135) target = $region12
    $region11: #{_lambda_.3} parent=5 // pred_region
      %s139 = ssub.s32 %s10, 1
      // Predicated region
      $region13: #{_lambda_.3} parent=11 // pred_check
        %p140 = pneg %p57
      $region14: #{_lambda_.3} parent=11 // pred_check_branch
        %142 = sbr.rel (%p140) target = $region16
      $region15: #{_lambda_.3} parent=11 // pred_region
        _
      $region16: #{_lambda_.3} parent=11 // pred_fallthru
        _
      // Predicated region
      $region17: #{_lambda_.3} parent=11 // pred_check
        %p143 = pneg %p78
      $region18: #{_lambda_.3} parent=11 // pred_check_branch
        %145 = sbr.rel (%p143) target = $region20
      $region19: #{_lambda_.3} parent=11 // pred_region
        _
      $region20: #{_lambda_.3} parent=11 // pred_fallthru
        _
      // Predicated region
      $region21: #{_lambda_.3} parent=11 // pred_check
        %p146 = pneg %p99
      $region22: #{_lambda_.3} parent=11 // pred_check_branch
        %148 = sbr.rel (%p146) target = $region24
      $region23: #{_lambda_.3} parent=11 // pred_region
        _
      $region24: #{_lambda_.3} parent=11 // pred_fallthru
        _
    $region12: #{_lambda_.3} parent=5 // pred_fallthru
      _
    %p149 = scmp.lt.s32.totalorder %s10, 2
    // Predicated region
    $region25: #{_lambda_.3} parent=5 // pred_check
      %p150 = pneg %p149
    $region26: #{_lambda_.3} parent=5 // pred_check_branch
      %152 = sbr.rel (%p150) target = $region28
    $region27: #{_lambda_.3} parent=5 // pred_region
      // Predicated region
      $region29: #{_lambda_.3} parent=27 // pred_check
        %p153 = pneg %p30
      $region30: #{_lambda_.3} parent=27 // pred_check_branch
        %155 = sbr.rel (%p153) target = $region32
      $region31: #{_lambda_.3} parent=27 // pred_region
        %p156 = scmp.lt.s32.totalorder %s10, 1
        %s157 = scalar_select %p156, %s10, 1
        %s158 = smul.addr %s157, 4
        %s159 = smul.addr %s158, 8
        %s160 = scalar_lea.vmem %s0, %s159
      $region32: #{_lambda_.3} parent=27 // pred_fallthru
        _
    $region28: #{_lambda_.3} parent=5 // pred_fallthru
      _
    %p161 = scmp.le.s32.totalorder 1, %s10
    %p162 = scmp.lt.s32.totalorder %s10, 3
    %p163 = pnand %p161, %p162
    %p164 = pneg %p163
    // Predicated region
    $region33: #{_lambda_.3} parent=5 // pred_check
      _
    $region34: #{_lambda_.3} parent=5 // pred_check_branch
      %166 = sbr.rel (%p163) target = $region36
    $region35: #{_lambda_.3} parent=5 // pred_region
      %s167 = ssub.s32 %s10, 1
      %p168 = scmp.lt.s32.totalorder %s15, 1
      %s169 = scalar_select %p168, %s15, 1
      %s170 = smul.addr %s169, 4
      %s171 = smul.addr %s170, 8
      %s172 = scalar_lea.vmem %s0, %s171
      %p173 = pneg %p36
      %p174 = pneg %p33
      %p175 = pneg %p57
      %p176 = pneg %p54
      %p177 = pneg %p78
      %p178 = pneg %p75
      %p179 = pneg %p99
      %p180 = pneg %p96
      %p181 = pneg %p125
      %p182 = pneg %p122
      %p183 = scmp.lt.s32.totalorder %s15, 1
      %s184 = scalar_select %p183, %s15, 1
      %s185 = smul.addr %s184, 3
      %s186 = smul.addr %s185, 8
      %s187 = scalar_lea.vmem %s4, %s186
      %p188 = scmp.lt.s32.totalorder %s15, 1
      %s189 = scalar_select %p188, %s15, 1
      %s190 = smul.addr %s189, 4
      %s191 = smul.addr %s190, 8
      %s192 = scalar_lea.vmem %s0, %s191
      %p193 = scmp.lt.s32.totalorder %s15, 1
      %s194 = scalar_select %p193, %s15, 1
      %s195 = smul.addr %s194, 3
      %s196 = smul.addr %s195, 8
      %s197 = scalar_lea.vmem %s4, %s196
      %v198 = vld [vmem:[%s192] sm:$0xff]
      %v199 = vld [vmem:[%s192 + $0x8] sm:$0xff]
      %v200 = vld [vmem:[%s192 + $0x10] sm:$0xf]
      %v201 = vld [vmem:[%s1] sm:$0xff]
      %v202 = vld [vmem:[%s1 + $0x8] sm:$0xff]
      %v203 = vld [vmem:[%s1 + $0x10] sm:$0xff]
      %v204 = vld [vmem:[%s1 + $0x18] sm:$0xff]
      %v205 = vld [vmem:[%s1 + $0x20] sm:$0xff]
      %v206 = vld [vmem:[%s1 + $0x28] sm:$0xff]
      %v207 = vld [vmem:[%s1 + $0x30] sm:$0xff]
      %v208 = vld [vmem:[%s1 + $0x38] sm:$0xff]
      %v209 = vld [vmem:[%s1 + $0x40] sm:$0xff]
      %v210 = vld [vmem:[%s1 + $0x48] sm:$0xff]
      %v211 = vld [vmem:[%s1 + $0x50] sm:$0xff]
      %v212 = vld [vmem:[%s1 + $0x58] sm:$0xff]
      %v213 = vld [vmem:[%s1 + $0x60] sm:$0xff]
      %v214 = vld [vmem:[%s1 + $0x68] sm:$0xff]
      %v215 = vld [vmem:[%s1 + $0x70] sm:$0xff]
      %v216 = vld [vmem:[%s1 + $0x78] sm:$0xff]
      %217 = vmatprep.subr.mxu0 0.0
      %218 = vmatpush1.msra.mxu0 %v201
      %219 = vmatprep.subr.mxu0 0.0
      %220 = vmatpush1.msra.mxu0 %v202
      %221 = vmatprep.subr.mxu0 0.0
      %222 = vmatpush1.msra.mxu0 %v203
      %223 = vmatprep.subr.mxu0 0.0
      %224 = vmatpush1.msra.mxu0 %v204
      %225 = vmatprep.subr.mxu0 0.0
      %226 = vmatpush1.msra.mxu0 %v205
      %227 = vmatprep.subr.mxu0 0.0
      %228 = vmatpush1.msra.mxu0 %v206
      %229 = vmatprep.subr.mxu0 0.0
      %230 = vmatpush1.msra.mxu0 %v207
      %231 = vmatprep.subr.mxu0 0.0
      %232 = vmatpush1.msra.mxu0 %v208
      %233 = vmatprep.subr.mxu0 0.0
      %234 = vmatpush1.msra.mxu0 %v209
      %235 = vmatprep.subr.mxu0 0.0
      %236 = vmatpush1.msra.mxu0 %v210
      %237 = vmatprep.subr.mxu0 0.0
      %238 = vmatpush1.msra.mxu0 %v211
      %239 = vmatprep.subr.mxu0 0.0
      %240 = vmatpush1.msra.mxu0 %v212
      %241 = vmatprep.subr.mxu0 0.0
      %242 = vmatpush1.msra.mxu0 %v213
      %243 = vmatprep.subr.mxu0 0.0
      %244 = vmatpush1.msra.mxu0 %v214
      %245 = vmatprep.subr.mxu0 0.0
      %246 = vmatpush1.msra.mxu0 %v215
      %247 = vmatprep.subr.mxu0 0.0
      %248 = vmatpush1.msra.mxu0 %v216
      %249 = vmatprep.subr.mxu0 0.0
      %250 = vmatpush1.msra.mxu0 0.0
      %251 = vmatprep.subr.mxu0 0.0
      %252 = vmatpush1.msra.mxu0 0.0
      %253 = vmatprep.subr.mxu0 0.0
      %254 = vmatpush1.msra.mxu0 0.0
      %255 = vmatprep.subr.mxu0 0.0
      %256 = vmatpush1.msra.mxu0 0.0
      %257 = vmatprep.subr.mxu0 0.0
      %258 = vmatpush1.msra.mxu0 0.0
      %259 = vmatprep.subr.mxu0 0.0
      %260 = vmatpush1.msra.mxu0 0.0
      %261 = vmatprep.subr.mxu0 0.0
      %262 = vmatpush1.msra.mxu0 0.0
      %263 = vmatprep.subr.mxu0 0.0
      %264 = vmatpush1.msra.mxu0 0.0
      %265 = vmatprep.subr.mxu0 0.0
      %266 = vmatpush1.msra.mxu0 0.0
      %267 = vmatprep.subr.mxu0 0.0
      %268 = vmatpush1.msra.mxu0 0.0
      %269 = vmatprep.subr.mxu0 0.0
      %270 = vmatpush1.msra.mxu0 0.0
      %271 = vmatprep.subr.mxu0 0.0
      %272 = vmatpush1.msra.mxu0 0.0
      %273 = vmatprep.subr.mxu0 0.0
      %274 = vmatpush1.msra.mxu0 0.0
      %275 = vmatprep.subr.mxu0 0.0
      %276 = vmatpush1.msra.mxu0 0.0
      %277 = vmatprep.subr.mxu0 0.0
      %278 = vmatpush1.msra.mxu0 0.0
      %279 = vmatprep.subr.mxu0 0.0
      %280 = vmatpush1.msra.mxu0 0.0
      %281 = vmatprep.mubr.f32.mxu0 0.0
      %282 = vmatmul.mubr.f32.gmra.mrb[0].mxu0 %v198
      %v283 = vpop.f32.mrb[0].mxu0
      %v284 = vadd.f32 0.0, %v283
      %v285 = vpop.f32.mrb[0].mxu0
      %286 = vmatprep.mubr.f32.mxu0 0.0
      %287 = vmatmul.mubr.f32.gmra.mrb[0].mxu0 %v199
      %v288 = vpop.f32.mrb[0].mxu0
      %v289 = vadd.f32 0.0, %v288
      %v290 = vpop.f32.mrb[0].mxu0
      %291 = vmatprep.mubr.f32.mxu0 0.0
      %292 = vmatmul.mubr.f32.gmra.mrb[0].mxu0 %v200
      %v293 = vpop.f32.mrb[0].mxu0
      %v294 = vadd.f32 0.0, %v293
      %v295 = vpop.f32.mrb[0].mxu0
      %296 = vdwg.mxu0
      %297 = vst [vmem:[#allocation2] sm:$0xff] %v284
      %298 = vst [vmem:[#allocation2 + $0x8] sm:$0xff] %v289
      %299 = vst [vmem:[#allocation2 + $0x10] sm:$0xf] %v294
      %v300 = vld [vmem:[#allocation2] sm:$0xff]
      %v301 = vld [vmem:[#allocation2 + $0x8] sm:$0xff]
      %v302 = vld [vmem:[#allocation2 + $0x10] sm:$0xf]
      %v303 = vld [vmem:[%s192 + $0x1] sm:$0xff]
      %v304 = vld [vmem:[%s192 + $0x9] sm:$0xff]
      %v305 = vld [vmem:[%s192 + $0x11] sm:$0xf]
      %s306 = scalar_lea.vmem %s1, 128
      %v307 = vld [vmem:[%s306] sm:$0xff]
      %v308 = vld [vmem:[%s306 + $0x8] sm:$0xff]
      %v309 = vld [vmem:[%s306 + $0x10] sm:$0xff]
      %v310 = vld [vmem:[%s306 + $0x18] sm:$0xff]
      %v311 = vld [vmem:[%s306 + $0x20] sm:$0xff]
      %v312 = vld [vmem:[%s306 + $0x28] sm:$0xff]
      %v313 = vld [vmem:[%s306 + $0x30] sm:$0xff]
      %v314 = vld [vmem:[%s306 + $0x38] sm:$0xff]
      %v315 = vld [vmem:[%s306 + $0x40] sm:$0xff]
      %v316 = vld [vmem:[%s306 + $0x48] sm:$0xff]
      %v317 = vld [vmem:[%s306 + $0x50] sm:$0xff]
      %v318 = vld [vmem:[%s306 + $0x58] sm:$0xff]
      %v319 = vld [vmem:[%s306 + $0x60] sm:$0xff]
      %v320 = vld [vmem:[%s306 + $0x68] sm:$0xff]
      %v321 = vld [vmem:[%s306 + $0x70] sm:$0xff]
      %v322 = vld [vmem:[%s306 + $0x78] sm:$0xff]
      %323 = vmatprep.subr.mxu0 0.0
      %324 = vmatpush1.msra.mxu0 %v307
      %325 = vmatprep.subr.mxu0 0.0
      %326 = vmatpush1.msra.mxu0 %v308
      %327 = vmatprep.subr.mxu0 0.0
      %328 = vmatpush1.msra.mxu0 %v309
      %329 = vmatprep.subr.mxu0 0.0
      %330 = vmatpush1.msra.mxu0 %v310
      %331 = vmatprep.subr.mxu0 0.0
      %332 = vmatpush1.msra.mxu0 %v311
      %333 = vmatprep.subr.mxu0 0.0
      %334 = vmatpush1.msra.mxu0 %v312
      %335 = vmatprep.subr.mxu0 0.0
      %336 = vmatpush1.msra.mxu0 %v313
      %337 = vmatprep.subr.mxu0 0.0
      %338 = vmatpush1.msra.mxu0 %v314
      %339 = vmatprep.subr.mxu0 0.0
      %340 = vmatpush1.msra.mxu0 %v315
      %341 = vmatprep.subr.mxu0 0.0
      %342 = vmatpush1.msra.mxu0 %v316
      %343 = vmatprep.subr.mxu0 0.0
      %344 = vmatpush1.msra.mxu0 %v317
      %345 = vmatprep.subr.mxu0 0.0
      %346 = vmatpush1.msra.mxu0 %v318
      %347 = vmatprep.subr.mxu0 0.0
      %348 = vmatpush1.msra.mxu0 %v319
      %349 = vmatprep.subr.mxu0 0.0
      %350 = vmatpush1.msra.mxu0 %v320
      %351 = vmatprep.subr.mxu0 0.0
      %352 = vmatpush1.msra.mxu0 %v321
      %353 = vmatprep.subr.mxu0 0.0
      %354 = vmatpush1.msra.mxu0 %v322
      %355 = vmatprep.subr.mxu0 0.0
      %356 = vmatpush1.msra.mxu0 0.0
      %357 = vmatprep.subr.mxu0 0.0
      %358 = vmatpush1.msra.mxu0 0.0
      %359 = vmatprep.subr.mxu0 0.0
      %360 = vmatpush1.msra.mxu0 0.0
      %361 = vmatprep.subr.mxu0 0.0
      %362 = vmatpush1.msra.mxu0 0.0
      %363 = vmatprep.subr.mxu0 0.0
      %364 = vmatpush1.msra.mxu0 0.0
      %365 = vmatprep.subr.mxu0 0.0
      %366 = vmatpush1.msra.mxu0 0.0
      %367 = vmatprep.subr.mxu0 0.0
      %368 = vmatpush1.msra.mxu0 0.0
      %369 = vmatprep.subr.mxu0 0.0
      %370 = vmatpush1.msra.mxu0 0.0
      %371 = vmatprep.subr.mxu0 0.0
      %372 = vmatpush1.msra.mxu0 0.0
      %373 = vmatprep.subr.mxu0 0.0
      %374 = vmatpush1.msra.mxu0 0.0
      %375 = vmatprep.subr.mxu0 0.0
      %376 = vmatpush1.msra.mxu0 0.0
      %377 = vmatprep.subr.mxu0 0.0
      %378 = vmatpush1.msra.mxu0 0.0
      %379 = vmatprep.subr.mxu0 0.0
      %380 = vmatpush1.msra.mxu0 0.0
      %381 = vmatprep.subr.mxu0 0.0
      %382 = vmatpush1.msra.mxu0 0.0
      %383 = vmatprep.subr.mxu0 0.0
      %384 = vmatpush1.msra.mxu0 0.0
      %385 = vmatprep.subr.mxu0 0.0
      %386 = vmatpush1.msra.mxu0 0.0
      %387 = vmatprep.mubr.f32.mxu0 0.0
      %388 = vmatmul.mubr.f32.gmra.mrb[0].mxu0 %v303
      %v389 = vpop.f32.mrb[0].mxu0
      %v390 = vadd.f32 0.0, %v389
      %v391 = vpop.f32.mrb[0].mxu0
      %392 = vmatprep.mubr.f32.mxu0 0.0
      %393 = vmatmul.mubr.f32.gmra.mrb[0].mxu0 %v304
      %v394 = vpop.f32.mrb[0].mxu0
      %v395 = vadd.f32 0.0, %v394
      %v396 = vpop.f32.mrb[0].mxu0
      %397 = vmatprep.mubr.f32.mxu0 0.0
      %398 = vmatmul.mubr.f32.gmra.mrb[0].mxu0 %v305
      %v399 = vpop.f32.mrb[0].mxu0
      %v400 = vadd.f32 0.0, %v399
      %v401 = vpop.f32.mrb[0].mxu0
      %402 = vdwg.mxu0
      %v403 = vadd.f32 %v300, %v390
      %v404 = vadd.f32 %v301, %v395
      %v405 = vadd.f32 %v302, %v400
      %406 = vst [vmem:[#allocation2] sm:$0xff] %v403
      %407 = vst [vmem:[#allocation2 + $0x8] sm:$0xff] %v404
      %408 = vst [vmem:[#allocation2 + $0x10] sm:$0xf] %v405
      %v409 = vld [vmem:[#allocation2] sm:$0xff]
      %v410 = vld [vmem:[#allocation2 + $0x8] sm:$0xff]
      %v411 = vld [vmem:[#allocation2 + $0x10] sm:$0xf]
      %v412 = vld [vmem:[%s192 + $0x5] sm:$0xff]
      %v413 = vld [vmem:[%s192 + $0xd] sm:$0xff]
      %v414 = vld [vmem:[%s192 + $0x15] sm:$0xf]
      %s415 = scalar_lea.vmem %s1, 256
      %v416 = vld [vmem:[%s415] sm:$0xff]
      %v417 = vld [vmem:[%s415 + $0x8] sm:$0xff]
      %v418 = vld [vmem:[%s415 + $0x10] sm:$0xff]
      %v419 = vld [vmem:[%s415 + $0x18] sm:$0xff]
      %v420 = vld [vmem:[%s415 + $0x20] sm:$0xff]
      %v421 = vld [vmem:[%s415 + $0x28] sm:$0xff]
      %v422 = vld [vmem:[%s415 + $0x30] sm:$0xff]
      %v423 = vld [vmem:[%s415 + $0x38] sm:$0xff]
      %v424 = vld [vmem:[%s415 + $0x40] sm:$0xff]
      %v425 = vld [vmem:[%s415 + $0x48] sm:$0xff]
      %v426 = vld [vmem:[%s415 + $0x50] sm:$0xff]
      %v427 = vld [vmem:[%s415 + $0x58] sm:$0xff]
      %v428 = vld [vmem:[%s415 + $0x60] sm:$0xff]
      %v429 = vld [vmem:[%s415 + $0x68] sm:$0xff]
      %v430 = vld [vmem:[%s415 + $0x70] sm:$0xff]
      %v431 = vld [vmem:[%s415 + $0x78] sm:$0xff]
      %432 = vmatprep.subr.mxu0 0.0
      %433 = vmatpush1.msra.mxu0 %v416
      %434 = vmatprep.subr.mxu0 0.0
      %435 = vmatpush1.msra.mxu0 %v417
      %436 = vmatprep.subr.mxu0 0.0
      %437 = vmatpush1.msra.mxu0 %v418
      %438 = vmatprep.subr.mxu0 0.0
      %439 = vmatpush1.msra.mxu0 %v419
      %440 = vmatprep.subr.mxu0 0.0
      %441 = vmatpush1.msra.mxu0 %v420
      %442 = vmatprep.subr.mxu0 0.0
      %443 = vmatpush1.msra.mxu0 %v421
      %444 = vmatprep.subr.mxu0 0.0
      %445 = vmatpush1.msra.mxu0 %v422
      %446 = vmatprep.subr.mxu0 0.0
      %447 = vmatpush1.msra.mxu0 %v423
      %448 = vmatprep.subr.mxu0 0.0
      %449 = vmatpush1.msra.mxu0 %v424
      %450 = vmatprep.subr.mxu0 0.0
      %451 = vmatpush1.msra.mxu0 %v425
      %452 = vmatprep.subr.mxu0 0.0
      %453 = vmatpush1.msra.mxu0 %v426
      %454 = vmatprep.subr.mxu0 0.0
      %455 = vmatpush1.msra.mxu0 %v427
      %456 = vmatprep.subr.mxu0 0.0
      %457 = vmatpush1.msra.mxu0 %v428
      %458 = vmatprep.subr.mxu0 0.0
      %459 = vmatpush1.msra.mxu0 %v429
      %460 = vmatprep.subr.mxu0 0.0
      %461 = vmatpush1.msra.mxu0 %v430
      %462 = vmatprep.subr.mxu0 0.0
      %463 = vmatpush1.msra.mxu0 %v431
      %464 = vmatprep.subr.mxu0 0.0
      %465 = vmatpush1.msra.mxu0 0.0
      %466 = vmatprep.subr.mxu0 0.0
      %467 = vmatpush1.msra.mxu0 0.0
      %468 = vmatprep.subr.mxu0 0.0
      %469 = vmatpush1.msra.mxu0 0.0
      %470 = vmatprep.subr.mxu0 0.0
      %471 = vmatpush1.msra.mxu0 0.0
      %472 = vmatprep.subr.mxu0 0.0
      %473 = vmatpush1.msra.mxu0 0.0
      %474 = vmatprep.subr.mxu0 0.0
      %475 = vmatpush1.msra.mxu0 0.0
      %476 = vmatprep.subr.mxu0 0.0
      %477 = vmatpush1.msra.mxu0 0.0
      %478 = vmatprep.subr.mxu0 0.0
      %479 = vmatpush1.msra.mxu0 0.0
      %480 = vmatprep.subr.mxu0 0.0
      %481 = vmatpush1.msra.mxu0 0.0
      %482 = vmatprep.subr.mxu0 0.0
      %483 = vmatpush1.msra.mxu0 0.0
      %484 = vmatprep.subr.mxu0 0.0
      %485 = vmatpush1.msra.mxu0 0.0
      %486 = vmatprep.subr.mxu0 0.0
      %487 = vmatpush1.msra.mxu0 0.0
      %488 = vmatprep.subr.mxu0 0.0
      %489 = vmatpush1.msra.mxu0 0.0
      %490 = vmatprep.subr.mxu0 0.0
      %491 = vmatpush1.msra.mxu0 0.0
      %492 = vmatprep.subr.mxu0 0.0
      %493 = vmatpush1.msra.mxu0 0.0
      %494 = vmatprep.subr.mxu0 0.0
      %495 = vmatpush1.msra.mxu0 0.0
      %496 = vmatprep.mubr.f32.mxu0 0.0
      %497 = vmatmul.mubr.f32.gmra.mrb[0].mxu0 %v412
      %v498 = vpop.f32.mrb[0].mxu0
      %v499 = vadd.f32 0.0, %v498
      %v500 = vpop.f32.mrb[0].mxu0
      %501 = vmatprep.mubr.f32.mxu0 0.0
      %502 = vmatmul.mubr.f32.gmra.mrb[0].mxu0 %v413
      %v503 = vpop.f32.mrb[0].mxu0
      %v504 = vadd.f32 0.0, %v503
      %v505 = vpop.f32.mrb[0].mxu0
      %506 = vmatprep.mubr.f32.mxu0 0.0
      %507 = vmatmul.mubr.f32.gmra.mrb[0].mxu0 %v414
      %v508 = vpop.f32.mrb[0].mxu0
      %v509 = vadd.f32 0.0, %v508
      %v510 = vpop.f32.mrb[0].mxu0
      %511 = vdwg.mxu0
      %v512 = vadd.f32 %v409, %v499
      %v513 = vadd.f32 %v410, %v504
      %v514 = vadd.f32 %v411, %v509
      %515 = vst [vmem:[#allocation2] sm:$0xff] %v512
      %516 = vst [vmem:[#allocation2 + $0x8] sm:$0xff] %v513
      %517 = vst [vmem:[#allocation2 + $0x10] sm:$0xf] %v514
      %v518 = vld [vmem:[#allocation2] sm:$0xff]
      %v519 = vld [vmem:[#allocation2 + $0x8] sm:$0xff]
      %v520 = vld [vmem:[#allocation2 + $0x10] sm:$0xf]
      %v521 = vld [vmem:[%s192 + $0x6] sm:$0xff]
      %v522 = vld [vmem:[%s192 + $0xe] sm:$0xff]
      %v523 = vld [vmem:[%s192 + $0x16] sm:$0xf]
      %s524 = scalar_lea.vmem %s1, 384
      %v525 = vld [vmem:[%s524] sm:$0xff]
      %v526 = vld [vmem:[%s524 + $0x8] sm:$0xff]
      %v527 = vld [vmem:[%s524 + $0x10] sm:$0xff]
      %v528 = vld [vmem:[%s524 + $0x18] sm:$0xff]
      %v529 = vld [vmem:[%s524 + $0x20] sm:$0xff]
      %v530 = vld [vmem:[%s524 + $0x28] sm:$0xff]
      %v531 = vld [vmem:[%s524 + $0x30] sm:$0xff]
      %v532 = vld [vmem:[%s524 + $0x38] sm:$0xff]
      %v533 = vld [vmem:[%s524 + $0x40] sm:$0xff]
      %v534 = vld [vmem:[%s524 + $0x48] sm:$0xff]
      %v535 = vld [vmem:[%s524 + $0x50] sm:$0xff]
      %v536 = vld [vmem:[%s524 + $0x58] sm:$0xff]
      %v537 = vld [vmem:[%s524 + $0x60] sm:$0xff]
      %v538 = vld [vmem:[%s524 + $0x68] sm:$0xff]
      %v539 = vld [vmem:[%s524 + $0x70] sm:$0xff]
      %v540 = vld [vmem:[%s524 + $0x78] sm:$0xff]
      %541 = vmatprep.subr.mxu0 0.0
      %542 = vmatpush1.msra.mxu0 %v525
      %543 = vmatprep.subr.mxu0 0.0
      %544 = vmatpush1.msra.mxu0 %v526
      %545 = vmatprep.subr.mxu0 0.0
      %546 = vmatpush1.msra.mxu0 %v527
      %547 = vmatprep.subr.mxu0 0.0
      %548 = vmatpush1.msra.mxu0 %v528
      %549 = vmatprep.subr.mxu0 0.0
      %550 = vmatpush1.msra.mxu0 %v529
      %551 = vmatprep.subr.mxu0 0.0
      %552 = vmatpush1.msra.mxu0 %v530
      %553 = vmatprep.subr.mxu0 0.0
      %554 = vmatpush1.msra.mxu0 %v531
      %555 = vmatprep.subr.mxu0 0.0
      %556 = vmatpush1.msra.mxu0 %v532
      %557 = vmatprep.subr.mxu0 0.0
      %558 = vmatpush1.msra.mxu0 %v533
      %559 = vmatprep.subr.mxu0 0.0
      %560 = vmatpush1.msra.mxu0 %v534
      %561 = vmatprep.subr.mxu0 0.0
      %562 = vmatpush1.msra.mxu0 %v535
      %563 = vmatprep.subr.mxu0 0.0
      %564 = vmatpush1.msra.mxu0 %v536
      %565 = vmatprep.subr.mxu0 0.0
      %566 = vmatpush1.msra.mxu0 %v537
      %567 = vmatprep.subr.mxu0 0.0
      %568 = vmatpush1.msra.mxu0 %v538
      %569 = vmatprep.subr.mxu0 0.0
      %570 = vmatpush1.msra.mxu0 %v539
      %571 = vmatprep.subr.mxu0 0.0
      %572 = vmatpush1.msra.mxu0 %v540
      %573 = vmatprep.subr.mxu0 0.0
      %574 = vmatpush1.msra.mxu0 0.0
      %575 = vmatprep.subr.mxu0 0.0
      %576 = vmatpush1.msra.mxu0 0.0
      %577 = vmatprep.subr.mxu0 0.0
      %578 = vmatpush1.msra.mxu0 0.0
      %579 = vmatprep.subr.mxu0 0.0
      %580 = vmatpush1.msra.mxu0 0.0
      %581 = vmatprep.subr.mxu0 0.0
      %582 = vmatpush1.msra.mxu0 0.0
      %583 = vmatprep.subr.mxu0 0.0
      %584 = vmatpush1.msra.mxu0 0.0
      %585 = vmatprep.subr.mxu0 0.0
      %586 = vmatpush1.msra.mxu0 0.0
      %587 = vmatprep.subr.mxu0 0.0
      %588 = vmatpush1.msra.mxu0 0.0
      %589 = vmatprep.subr.mxu0 0.0
      %590 = vmatpush1.msra.mxu0 0.0
      %591 = vmatprep.subr.mxu0 0.0
      %592 = vmatpush1.msra.mxu0 0.0
      %593 = vmatprep.subr.mxu0 0.0
      %594 = vmatpush1.msra.mxu0 0.0
      %595 = vmatprep.subr.mxu0 0.0
      %596 = vmatpush1.msra.mxu0 0.0
      %597 = vmatprep.subr.mxu0 0.0
      %598 = vmatpush1.msra.mxu0 0.0
      %599 = vmatprep.subr.mxu0 0.0
      %600 = vmatpush1.msra.mxu0 0.0
      %601 = vmatprep.subr.mxu0 0.0
      %602 = vmatpush1.msra.mxu0 0.0
      %603 = vmatprep.subr.mxu0 0.0
      %604 = vmatpush1.msra.mxu0 0.0
      %605 = vmatprep.mubr.f32.mxu0 0.0
      %606 = vmatmul.mubr.f32.gmra.mrb[0].mxu0 %v521
      %v607 = vpop.f32.mrb[0].mxu0
      %v608 = vadd.f32 0.0, %v607
      %v609 = vpop.f32.mrb[0].mxu0
      %610 = vmatprep.mubr.f32.mxu0 0.0
      %611 = vmatmul.mubr.f32.gmra.mrb[0].mxu0 %v522
      %v612 = vpop.f32.mrb[0].mxu0
      %v613 = vadd.f32 0.0, %v612
      %v614 = vpop.f32.mrb[0].mxu0
      %615 = vmatprep.mubr.f32.mxu0 0.0
      %616 = vmatmul.mubr.f32.gmra.mrb[0].mxu0 %v523
      %v617 = vpop.f32.mrb[0].mxu0
      %v618 = vadd.f32 0.0, %v617
      %v619 = vpop.f32.mrb[0].mxu0
      %620 = vdwg.mxu0
      %v621 = vadd.f32 %v518, %v608
      %v622 = vadd.f32 %v519, %v613
      %v623 = vadd.f32 %v520, %v618
      %624 = vst [vmem:[#allocation2] sm:$0xff] %v621
      %625 = vst [vmem:[#allocation2 + $0x8] sm:$0xff] %v622
      %626 = vst [vmem:[#allocation2 + $0x10] sm:$0xf] %v623
      %v627 = vld [vmem:[#allocation2] sm:$0xff]
      %v628 = vld [vmem:[#allocation2 + $0x8] sm:$0xff]
      %v629 = vld [vmem:[#allocation2 + $0x10] sm:$0xf]
      %v630 = vld [vmem:[%s2] sm:$0x1]
      %v632 = vlaneseq
      %v633 = vshrl.u32 %v632, 7
      %v634 = vsub.s32 0, %v633
      %v635 = vrot.slane %v630, %v634
      %v637 = vmul.f32 %v627, %v635
      %v638 = vmul.f32 %v628, %v635
      %v639 = vmul.f32 %v629, %v635
      %v640 = vld [vmem:[%s3] sm:$0x1]
      %v642 = vlaneseq
      %v643 = vshrl.u32 %v642, 7
      %v644 = vsub.s32 0, %v643
      %v645 = vrot.slane %v640, %v644
      %v647 = vadd.f32 %v637, %v645
      %v648 = vadd.f32 %v638, %v645
      %v649 = vadd.f32 %v639, %v645
      %v650 = vmax.f32 %v647, 0.0
      %v651 = vmax.f32 %v648, 0.0
      %v652 = vmax.f32 %v649, 0.0
      %vm653 = vcmask 523264
      %654 = vst.msk [vmem:[%s197] sm:$0xff] %vm653, %v650
      %655 = vst.msk [vmem:[%s197 + $0x8] sm:$0xff] %vm653, %v651
      %vm656 = vcmask 519168
      %657 = vst.msk [vmem:[%s197 + $0x10] sm:$0xf] %vm656, %v652
      %p658 = scmp.lt.s32.totalorder %s15, 1
      %s659 = scalar_select %p658, %s15, 1
      %s660 = smul.addr %s659, 3
      %s661 = smul.addr %s660, 8
      %s662 = scalar_lea.vmem %s4, %s661
      // Predicated region
      $region37: #{_lambda_.3} parent=35 // pred_check
        %p663 = pneg %p122
      $region38: #{_lambda_.3} parent=35 // pred_check_branch
        %665 = sbr.rel (%p663) target = $region40
      $region39: #{_lambda_.3} parent=35 // pred_region
        _
      $region40: #{_lambda_.3} parent=35 // pred_fallthru
        _
    $region36: #{_lambda_.3} parent=5 // pred_fallthru
      _
    %p666 = scmp.le.s32.totalorder 2, %s10
    // Predicated region
    $region41: #{_lambda_.3} parent=5 // pred_check
      %p667 = pneg %p666
    $region42: #{_lambda_.3} parent=5 // pred_check_branch
      %669 = sbr.rel (%p667) target = $region44
    $region43: #{_lambda_.3} parent=5 // pred_region
      %s670 = ssub.s32 %s10, 2
      // Predicated region
      $region45: #{_lambda_.3} parent=43 // pred_check
        %p671 = pneg %p128
      $region46: #{_lambda_.3} parent=43 // pred_check_branch
        %673 = sbr.rel (%p671) target = $region48
      $region47: #{_lambda_.3} parent=43 // pred_region
        %p674 = scmp.lt.s32.totalorder %s16, 1
        %s675 = scalar_select %p674, %s16, 1
        %s676 = smul.addr %s675, 3
        %s677 = smul.addr %s676, 8
        %s678 = scalar_lea.vmem %s4, %s677
      $region48: #{_lambda_.3} parent=43 // pred_fallthru
        _
    $region44: #{_lambda_.3} parent=5 // pred_fallthru
      _
  $region6: #{_lambda_.3} parent=0 // loop_footer
    %s14 = sadd.s32 1, %s10
  $region7: #{_lambda_.3} parent=0 // loop_footer_branch
    %9 = sbr.rel target = $region3
  $region8: #{_lambda_.3} parent=0 // loop_exit
    _

</llo_original>
